<compile_context>
chip_gen: v5e
topology: v5e:2x2
jax: 0.10.0
libtpu: 0.0.40
codegen_flags: <defaults>
</compile_context>

<pallas_src>
import functools
import numpy as np
import jax
import jax.numpy as jnp
from jax.experimental import pallas as pl
from jax.experimental.pallas import tpu as pltpu

LANE = 128   # vreg lane width
SUB = 8      # vreg sublane count (batch padded to this)


# --------------------------- packed-slab layout ----------------------------- #

def _ceil8(n):
    return (n + 7) // 8 * 8


def build_layout(D):
    """Static row offsets (all 8-aligned) of every sub-tensor in the slab."""
    offs, cur = {}, 0

    def alloc(name, rows):
        nonlocal cur
        offs[name] = cur
        cur += _ceil8(rows)

    for name in ("wir", "wiz", "win", "wibr", "wibz", "wibn"):   # (D, 128) each
        alloc(name, D)
    for name in ("whr", "whz", "whn", "wfcf", "wfcb"):           # (128, 128) each
        alloc(name, LANE)
    for name in ("bcfr", "bcfz", "bcfn", "bnf",
                 "bcbr", "bcbz", "bcbn", "bnb", "bfc"):          # 1 row each
        alloc(name, 1)
    return offs, cur


def pack_params(params, D, H):
    """One-time host-side packing of all weights/biases into a single f32 slab."""
    offs, rows = build_layout(D)
    slab = np.zeros((rows, LANE), np.float32)

    def put(name, mat):                      # mat: (r, c) with r,c <= block size
        r, c = mat.shape
        slab[offs[name]:offs[name] + r, :c] = mat

    w_ih = np.asarray(params["weight_ih_l0"], np.float32)            # (3H, D)
    w_hh = np.asarray(params["weight_hh_l0"], np.float32)            # (3H, H)
    b_ih = np.asarray(params["bias_ih_l0"], np.float32)
    b_hh = np.asarray(params["bias_hh_l0"], np.float32)
    w_ihb = np.asarray(params["weight_ih_l0_reverse"], np.float32)
    b_ihb = np.asarray(params["bias_ih_l0_reverse"], np.float32)
    b_hhb = np.asarray(params["bias_hh_l0_reverse"], np.float32)
    w_fc = np.asarray(params["fc_weight"], np.float32)               # (H, 2H)
    b_fc = np.asarray(params["fc_bias"], np.float32)                 # (H,)

    # per-gate transposed input weights (D, H), gates lane-aligned at col 0
    for i, name in enumerate(("wir", "wiz", "win")):
        put(name, w_ih[i * H:(i + 1) * H, :].T)
    for i, name in enumerate(("wibr", "wibz", "wibn")):
        put(name, w_ihb[i * H:(i + 1) * H, :].T)
    # per-gate transposed hidden weights (H, H) into zero-padded (128,128) blocks
    for i, name in enumerate(("whr", "whz", "whn")):
        put(name, w_hh[i * H:(i + 1) * H, :].T)
    # fc halves, transposed, zero-padded to (128,128)
    put("wfcf", w_fc[:, :H].T)
    put("wfcb", w_fc[:, H:].T)
    # biases: r/z gates get b_ih + b_hh folded; the n-gate hidden bias stays
    # separate (it is multiplied by r inside the cell).
    put("bcfr", (b_ih[0:H] + b_hh[0:H])[None, :])
    put("bcfz", (b_ih[H:2 * H] + b_hh[H:2 * H])[None, :])
    put("bcfn", b_ih[2 * H:3 * H][None, :])
    put("bnf", b_hh[2 * H:3 * H][None, :])
    put("bcbr", (b_ihb[0:H] + b_hhb[0:H])[None, :])
    put("bcbz", (b_ihb[H:2 * H] + b_hhb[H:2 * H])[None, :])
    put("bcbn", b_ihb[2 * H:3 * H][None, :])
    put("bnb", b_hhb[2 * H:3 * H][None, :])
    put("bfc", b_fc[None, :])
    return jnp.asarray(slab), offs


# ------------------------------ Pallas kernel ------------------------------- #

def make_kernel(T, D, offs):
    def kernel(x_ref, w_ref, o_ref):
        # x_ref : (T*8, D)  time-major, batch padded to 8 sublanes (zeros)
        # w_ref : (rows, 128) packed parameter slab
        # o_ref : (8, 128)  dense output tile (valid region [:B, :H])
        x = x_ref[...]

        # ---- hoisted forward input projection, one dot per lane-aligned gate
        gi_r = (jnp.dot(x, w_ref[offs["wir"]:offs["wir"] + D, :],
                        preferred_element_type=jnp.float32)
                + w_ref[offs["bcfr"]:offs["bcfr"] + 1, :])          # (T*8, 128)
        gi_z = (jnp.dot(x, w_ref[offs["wiz"]:offs["wiz"] + D, :],
                        preferred_element_type=jnp.float32)
                + w_ref[offs["bcfz"]:offs["bcfz"] + 1, :])
        gi_n = (jnp.dot(x, w_ref[offs["win"]:offs["win"] + D, :],
                        preferred_element_type=jnp.float32)
                + w_ref[offs["bcfn"]:offs["bcfn"] + 1, :])

        w_hr = w_ref[offs["whr"]:offs["whr"] + LANE, :]              # (128, 128)
        w_hz = w_ref[offs["whz"]:offs["whz"] + LANE, :]
        w_hn = w_ref[offs["whn"]:offs["whn"] + LANE, :]
        bnf = jnp.broadcast_to(w_ref[offs["bnf"]:offs["bnf"] + 1, :],
                               (SUB, LANE))                          # hoisted

        # ---- forward recurrence, fully unrolled; only the three independent
        #      whole-vreg (8,128)@(128,128) dots sit on the serial h-chain.
        h = jnp.zeros((SUB, LANE), jnp.float32)
        for t in range(T):
            r0 = t * SUB                                             # tile-aligned
            hr = jnp.dot(h, w_hr, preferred_element_type=jnp.float32)
            hz = jnp.dot(h, w_hz, preferred_element_type=jnp.float32)
            hn = jnp.dot(h, w_hn, preferred_element_type=jnp.float32)
            r = jax.nn.sigmoid(gi_r[r0:r0 + SUB, :] + hr)
            z = jax.nn.sigmoid(gi_z[r0:r0 + SUB, :] + hz)
            n = jnp.tanh(gi_n[r0:r0 + SUB, :] + r * (hn + bnf))
            h = (1.0 - z) * n + z * h
        h_fwd = h

        # ---- backward direction: one reverse-cell step on x[:, -1] with h0 == 0
        #      -> gh == b_hh_reverse exactly, no hidden matmul needed.
        x_last = x[(T - 1) * SUB:T * SUB, :]                         # (8, D)
        gb_r = (jnp.dot(x_last, w_ref[offs["wibr"]:offs["wibr"] + D, :],
                        preferred_element_type=jnp.float32)
                + w_ref[offs["bcbr"]:offs["bcbr"] + 1, :])
        gb_z = (jnp.dot(x_last, w_ref[offs["wibz"]:offs["wibz"] + D, :],
                        preferred_element_type=jnp.float32)
                + w_ref[offs["bcbz"]:offs["bcbz"] + 1, :])
        gb_n = (jnp.dot(x_last, w_ref[offs["wibn"]:offs["wibn"] + D, :],
                        preferred_element_type=jnp.float32)
                + w_ref[offs["bcbn"]:offs["bcbn"] + 1, :])
        rb = jax.nn.sigmoid(gb_r)
        zb = jax.nn.sigmoid(gb_z)
        nb = jnp.tanh(gb_n + rb * w_ref[offs["bnb"]:offs["bnb"] + 1, :])
        h_bwd = (1.0 - zb) * nb                                      # (1-z)*n + z*0

        # ---- fc as two padded (128,128) dots + tanh; dense (8,128) store
        y = jnp.tanh(
            jnp.dot(h_fwd, w_ref[offs["wfcf"]:offs["wfcf"] + LANE, :],
                    preferred_element_type=jnp.float32)
            + jnp.dot(h_bwd, w_ref[offs["wfcb"]:offs["wfcb"] + LANE, :],
                      preferred_element_type=jnp.float32)
            + w_ref[offs["bfc"]:offs["bfc"] + 1, :])
        o_ref[...] = y

    return kernel


# -------------------------------- Wrapper ----------------------------------- #

def make_gru_encoder(params, B, T, D, H):
    """Builds the packed slab ONCE and returns a jitted forward: x -> (1, B, H)."""
    assert B <= SUB, "this micro-kernel packs the batch into one sublane tile"
    slab, offs = build_layout_and_pack = pack_params(params, D, H)

    vmem = pl.BlockSpec(memory_space=pltpu.MemorySpace.VMEM)
    call = pl.pallas_call(
        make_kernel(T, D, offs),
        out_shape=jax.ShapeDtypeStruct((SUB, LANE), jnp.float32),
        in_specs=[vmem, vmem],
        out_specs=vmem,
    )

    @jax.jit
    def forward(x, slab_arg):
        # Only x preprocessing remains on the per-call path.
        xt = jnp.transpose(x.astype(jnp.float32), (1, 0, 2))       # (T, B, D)
        xt = jnp.pad(xt, ((0, 0), (0, SUB - B), (0, 0)))           # (T, 8, D)
        xf = xt.reshape(T * SUB, D)
        out = call(xf, slab_arg)                                   # (8, 128)
        return out[None, :B, :H]                                   # (1, B, H)

    return functools.partial(forward, slab_arg=slab) if False else (lambda x: forward(x, slab))


# --------------------------- Pure-JAX reference ------------------------------ #

def reference_forward(x, params):
    B, T, D = x.shape
    H = params["weight_hh_l0"].shape[1]

    def cell(x_t, h, w_ih, w_hh, b_ih, b_hh):
        gi = x_t @ w_ih.T + b_ih
        gh = h @ w_hh.T + b_hh
        i_r, i_z, i_n = gi[:, :H], gi[:, H:2 * H], gi[:, 2 * H:]
        h_r, h_z, h_n = gh[:, :H], gh[:, H:2 * H], gh[:, 2 * H:]
        r = jax.nn.sigmoid(i_r + h_r)
        z = jax.nn.sigmoid(i_z + h_z)
        n = jnp.tanh(i_n + r * h_n)
        return (1.0 - z) * n + z * h

    h = jnp.zeros((B, H), jnp.float32)
    for tt in range(T):
        h = cell(x[:, tt], h, params["weight_ih_l0"], params["weight_hh_l0"],
                 params["bias_ih_l0"], params["bias_hh_l0"])
    h_fwd_last = h

    hb = jnp.zeros((B, H), jnp.float32)
    outs_b = [None] * T
    for tt in range(T - 1, -1, -1):
        hb = cell(x[:, tt], hb, params["weight_ih_l0_reverse"],
                  params["weight_hh_l0_reverse"],
                  params["bias_ih_l0_reverse"], params["bias_hh_l0_reverse"])
        outs_b[tt] = hb
    h_bwd_at_last = outs_b[T - 1]

    feat = jnp.concatenate([h_fwd_last, h_bwd_at_last], axis=-1)
    y = jnp.tanh(feat @ params["fc_weight"].T + params["fc_bias"])
    return y[None, :, :]


# ---------------------------------- Main ------------------------------------- #

def init_params(key, input_dim, hidden_dim):
    H, D = hidden_dim, input_dim
    k_gru = 1.0 / np.sqrt(H)
    k_fc = 1.0 / np.sqrt(2 * H)
    names_shapes = [
        ("weight_ih_l0", (3 * H, D)), ("weight_hh_l0", (3 * H, H)),
        ("bias_ih_l0", (3 * H,)), ("bias_hh_l0", (3 * H,)),
        ("weight_ih_l0_reverse", (3 * H, D)), ("weight_hh_l0_reverse", (3 * H, H)),
        ("bias_ih_l0_reverse", (3 * H,)), ("bias_hh_l0_reverse", (3 * H,)),
    ]
    params = {}
    keys = jax.random.split(key, len(names_shapes) + 2)
    for (name, shape), k in zip(names_shapes, keys[:-2]):
        params[name] = jax.random.uniform(k, shape, jnp.float32, -k_gru, k_gru)
    params["fc_weight"] = jax.random.uniform(keys[-2], (H, 2 * H), jnp.float32,
                                             -k_fc, k_fc)
    params["fc_bias"] = jax.random.uniform(keys[-1], (H,), jnp.float32,
                                           -k_fc, k_fc)
    return params


if __name__ == "__main__":
    B, T, D, H = 2, 8, 16, 32   # batch, seq, input_dim, hidden_dim

    key = jax.random.PRNGKey(0)
    kx, kp = jax.random.split(key)
    x = jax.random.normal(kx, (B, T, D), jnp.float32)
    params = init_params(kp, D, H)

    encoder = make_gru_encoder(params, B, T, D, H)   # slab packed once here
    y = jax.block_until_ready(encoder(x))

    y_ref = jax.block_until_ready(reference_forward(x, params))
    assert y.shape == (1, B, H), y.shape
    np.testing.assert_allclose(np.asarray(y), np.asarray(y_ref),
                               rtol=5e-3, atol=5e-3)

    print("KERNEL_OK")
</pallas_src>

<mosaic_0001>
module attributes {stable_mosaic.version = 11 : i64} {
  func.func @kernel(%arg0: memref<64x16xf32, #tpu.memory_space<vmem>>, %arg1: memref<808x128xf32, #tpu.memory_space<vmem>>, %arg2: memref<8x128xf32, #tpu.memory_space<vmem>>) attributes {dimension_semantics = [], scalar_prefetch = 0 : i64, scratch_operands = 0 : i64, tpu.core_type = #tpu.core_type<tc>} {
    %c0 = arith.constant 0 : index
    %c0_0 = arith.constant 0 : index
    %0 = vector.load %arg0[%c0, %c0_0] : memref<64x16xf32, #tpu.memory_space<vmem>>, vector<64x16xf32>
    %c0_1 = arith.constant 0 : index
    %c0_2 = arith.constant 0 : index
    %1 = vector.load %arg1[%c0_1, %c0_2] : memref<808x128xf32, #tpu.memory_space<vmem>>, vector<16x128xf32>
    %cst = arith.constant dense<0.000000e+00> : vector<64x128xf32>
    %2 = tpu.matmul %0, %1, %cst {dimension_numbers = #tpu.dot_dimension_numbers<[1], [0], [0], [1], [0, 0, 1, 1], [], []>} : vector<64x16xf32>, vector<16x128xf32>, vector<64x128xf32> -> vector<64x128xf32>
    %c736 = arith.constant 736 : index
    %c0_3 = arith.constant 0 : index
    %3 = vector.load %arg1[%c736, %c0_3] : memref<808x128xf32, #tpu.memory_space<vmem>>, vector<1x128xf32>
    %4 = vector.broadcast %3 : vector<1x128xf32> to vector<64x128xf32>
    %5 = arith.addf %2, %4 : vector<64x128xf32>
    %c16 = arith.constant 16 : index
    %c0_4 = arith.constant 0 : index
    %6 = vector.load %arg1[%c16, %c0_4] : memref<808x128xf32, #tpu.memory_space<vmem>>, vector<16x128xf32>
    %cst_5 = arith.constant dense<0.000000e+00> : vector<64x128xf32>
    %7 = tpu.matmul %0, %6, %cst_5 {dimension_numbers = #tpu.dot_dimension_numbers<[1], [0], [0], [1], [0, 0, 1, 1], [], []>} : vector<64x16xf32>, vector<16x128xf32>, vector<64x128xf32> -> vector<64x128xf32>
    %c744 = arith.constant 744 : index
    %c0_6 = arith.constant 0 : index
    %8 = vector.load %arg1[%c744, %c0_6] : memref<808x128xf32, #tpu.memory_space<vmem>>, vector<1x128xf32>
    %9 = vector.broadcast %8 : vector<1x128xf32> to vector<64x128xf32>
    %10 = arith.addf %7, %9 : vector<64x128xf32>
    %c32 = arith.constant 32 : index
    %c0_7 = arith.constant 0 : index
    %11 = vector.load %arg1[%c32, %c0_7] : memref<808x128xf32, #tpu.memory_space<vmem>>, vector<16x128xf32>
    %cst_8 = arith.constant dense<0.000000e+00> : vector<64x128xf32>
    %12 = tpu.matmul %0, %11, %cst_8 {dimension_numbers = #tpu.dot_dimension_numbers<[1], [0], [0], [1], [0, 0, 1, 1], [], []>} : vector<64x16xf32>, vector<16x128xf32>, vector<64x128xf32> -> vector<64x128xf32>
    %c752 = arith.constant 752 : index
    %c0_9 = arith.constant 0 : index
    %13 = vector.load %arg1[%c752, %c0_9] : memref<808x128xf32, #tpu.memory_space<vmem>>, vector<1x128xf32>
    %14 = vector.broadcast %13 : vector<1x128xf32> to vector<64x128xf32>
    %15 = arith.addf %12, %14 : vector<64x128xf32>
    %c96 = arith.constant 96 : index
    %c0_10 = arith.constant 0 : index
    %16 = vector.load %arg1[%c96, %c0_10] : memref<808x128xf32, #tpu.memory_space<vmem>>, vector<128x128xf32>
    %c224 = arith.constant 224 : index
    %c0_11 = arith.constant 0 : index
    %17 = vector.load %arg1[%c224, %c0_11] : memref<808x128xf32, #tpu.memory_space<vmem>>, vector<128x128xf32>
    %c352 = arith.constant 352 : index
    %c0_12 = arith.constant 0 : index
    %18 = vector.load %arg1[%c352, %c0_12] : memref<808x128xf32, #tpu.memory_space<vmem>>, vector<128x128xf32>
    %c760 = arith.constant 760 : index
    %c0_13 = arith.constant 0 : index
    %19 = vector.load %arg1[%c760, %c0_13] : memref<808x128xf32, #tpu.memory_space<vmem>>, vector<1x128xf32>
    %20 = vector.shape_cast %19 : vector<1x128xf32> to vector<1x128xf32>
    %21 = vector.broadcast %20 : vector<1x128xf32> to vector<8x128xf32>
    %cst_14 = arith.constant 0.000000e+00 : f32
    %22 = vector.broadcast %cst_14 : f32 to vector<8x128xf32>
    %cst_15 = arith.constant dense<0.000000e+00> : vector<8x128xf32>
    %23 = tpu.matmul %22, %16, %cst_15 {dimension_numbers = #tpu.dot_dimension_numbers<[1], [0], [0], [1], [0, 0, 1, 1], [], []>} : vector<8x128xf32>, vector<128x128xf32>, vector<8x128xf32> -> vector<8x128xf32>
    %cst_16 = arith.constant dense<0.000000e+00> : vector<8x128xf32>
    %24 = tpu.matmul %22, %17, %cst_16 {dimension_numbers = #tpu.dot_dimension_numbers<[1], [0], [0], [1], [0, 0, 1, 1], [], []>} : vector<8x128xf32>, vector<128x128xf32>, vector<8x128xf32> -> vector<8x128xf32>
    %cst_17 = arith.constant dense<0.000000e+00> : vector<8x128xf32>
    %25 = tpu.matmul %22, %18, %cst_17 {dimension_numbers = #tpu.dot_dimension_numbers<[1], [0], [0], [1], [0, 0, 1, 1], [], []>} : vector<8x128xf32>, vector<128x128xf32>, vector<8x128xf32> -> vector<8x128xf32>
    %26 = vector.extract_strided_slice %5 {offsets = [0, 0], sizes = [8, 128], strides = [1, 1]} : vector<64x128xf32> to vector<8x128xf32>
    %27 = arith.addf %26, %23 : vector<8x128xf32>
    %28 = arith.negf %27 : vector<8x128xf32>
    %29 = math.exp %28 : vector<8x128xf32>
    %cst_18 = arith.constant 1.000000e+00 : f32
    %30 = vector.broadcast %cst_18 : f32 to vector<8x128xf32>
    %31 = arith.addf %30, %29 : vector<8x128xf32>
    %32 = arith.divf %30, %31 : vector<8x128xf32>
    %33 = vector.extract_strided_slice %10 {offsets = [0, 0], sizes = [8, 128], strides = [1, 1]} : vector<64x128xf32> to vector<8x128xf32>
    %34 = arith.addf %33, %24 : vector<8x128xf32>
    %35 = arith.negf %34 : vector<8x128xf32>
    %36 = math.exp %35 : vector<8x128xf32>
    %cst_19 = arith.constant 1.000000e+00 : f32
    %37 = vector.broadcast %cst_19 : f32 to vector<8x128xf32>
    %38 = arith.addf %37, %36 : vector<8x128xf32>
    %39 = arith.divf %37, %38 : vector<8x128xf32>
    %40 = vector.extract_strided_slice %15 {offsets = [0, 0], sizes = [8, 128], strides = [1, 1]} : vector<64x128xf32> to vector<8x128xf32>
    %41 = arith.addf %25, %21 : vector<8x128xf32>
    %42 = arith.mulf %32, %41 : vector<8x128xf32>
    %43 = arith.addf %40, %42 : vector<8x128xf32>
    %44 = math.tanh %43 : vector<8x128xf32>
    %cst_20 = arith.constant 1.000000e+00 : f32
    %45 = vector.broadcast %cst_20 : f32 to vector<8x128xf32>
    %46 = arith.subf %45, %39 : vector<8x128xf32>
    %47 = arith.mulf %46, %44 : vector<8x128xf32>
    %48 = arith.mulf %39, %22 : vector<8x128xf32>
    %49 = arith.addf %47, %48 : vector<8x128xf32>
    %cst_21 = arith.constant dense<0.000000e+00> : vector<8x128xf32>
    %50 = tpu.matmul %49, %16, %cst_21 {dimension_numbers = #tpu.dot_dimension_numbers<[1], [0], [0], [1], [0, 0, 1, 1], [], []>} : vector<8x128xf32>, vector<128x128xf32>, vector<8x128xf32> -> vector<8x128xf32>
    %cst_22 = arith.constant dense<0.000000e+00> : vector<8x128xf32>
    %51 = tpu.matmul %49, %17, %cst_22 {dimension_numbers = #tpu.dot_dimension_numbers<[1], [0], [0], [1], [0, 0, 1, 1], [], []>} : vector<8x128xf32>, vector<128x128xf32>, vector<8x128xf32> -> vector<8x128xf32>
    %cst_23 = arith.constant dense<0.000000e+00> : vector<8x128xf32>
    %52 = tpu.matmul %49, %18, %cst_23 {dimension_numbers = #tpu.dot_dimension_numbers<[1], [0], [0], [1], [0, 0, 1, 1], [], []>} : vector<8x128xf32>, vector<128x128xf32>, vector<8x128xf32> -> vector<8x128xf32>
    %53 = vector.extract_strided_slice %5 {offsets = [8, 0], sizes = [8, 128], strides = [1, 1]} : vector<64x128xf32> to vector<8x128xf32>
    %54 = arith.addf %53, %50 : vector<8x128xf32>
    %55 = arith.negf %54 : vector<8x128xf32>
    %56 = math.exp %55 : vector<8x128xf32>
    %cst_24 = arith.constant 1.000000e+00 : f32
    %57 = vector.broadcast %cst_24 : f32 to vector<8x128xf32>
    %58 = arith.addf %57, %56 : vector<8x128xf32>
    %59 = arith.divf %57, %58 : vector<8x128xf32>
    %60 = vector.extract_strided_slice %10 {offsets = [8, 0], sizes = [8, 128], strides = [1, 1]} : vector<64x128xf32> to vector<8x128xf32>
    %61 = arith.addf %60, %51 : vector<8x128xf32>
    %62 = arith.negf %61 : vector<8x128xf32>
    %63 = math.exp %62 : vector<8x128xf32>
    %cst_25 = arith.constant 1.000000e+00 : f32
    %64 = vector.broadcast %cst_25 : f32 to vector<8x128xf32>
    %65 = arith.addf %64, %63 : vector<8x128xf32>
    %66 = arith.divf %64, %65 : vector<8x128xf32>
    %67 = vector.extract_strided_slice %15 {offsets = [8, 0], sizes = [8, 128], strides = [1, 1]} : vector<64x128xf32> to vector<8x128xf32>
    %68 = arith.addf %52, %21 : vector<8x128xf32>
    %69 = arith.mulf %59, %68 : vector<8x128xf32>
    %70 = arith.addf %67, %69 : vector<8x128xf32>
    %71 = math.tanh %70 : vector<8x128xf32>
    %cst_26 = arith.constant 1.000000e+00 : f32
    %72 = vector.broadcast %cst_26 : f32 to vector<8x128xf32>
    %73 = arith.subf %72, %66 : vector<8x128xf32>
    %74 = arith.mulf %73, %71 : vector<8x128xf32>
    %75 = arith.mulf %66, %49 : vector<8x128xf32>
    %76 = arith.addf %74, %75 : vector<8x128xf32>
    %cst_27 = arith.constant dense<0.000000e+00> : vector<8x128xf32>
    %77 = tpu.matmul %76, %16, %cst_27 {dimension_numbers = #tpu.dot_dimension_numbers<[1], [0], [0], [1], [0, 0, 1, 1], [], []>} : vector<8x128xf32>, vector<128x128xf32>, vector<8x128xf32> -> vector<8x128xf32>
    %cst_28 = arith.constant dense<0.000000e+00> : vector<8x128xf32>
    %78 = tpu.matmul %76, %17, %cst_28 {dimension_numbers = #tpu.dot_dimension_numbers<[1], [0], [0], [1], [0, 0, 1, 1], [], []>} : vector<8x128xf32>, vector<128x128xf32>, vector<8x128xf32> -> vector<8x128xf32>
    %cst_29 = arith.constant dense<0.000000e+00> : vector<8x128xf32>
    %79 = tpu.matmul %76, %18, %cst_29 {dimension_numbers = #tpu.dot_dimension_numbers<[1], [0], [0], [1], [0, 0, 1, 1], [], []>} : vector<8x128xf32>, vector<128x128xf32>, vector<8x128xf32> -> vector<8x128xf32>
    %80 = vector.extract_strided_slice %5 {offsets = [16, 0], sizes = [8, 128], strides = [1, 1]} : vector<64x128xf32> to vector<8x128xf32>
    %81 = arith.addf %80, %77 : vector<8x128xf32>
    %82 = arith.negf %81 : vector<8x128xf32>
    %83 = math.exp %82 : vector<8x128xf32>
    %cst_30 = arith.constant 1.000000e+00 : f32
    %84 = vector.broadcast %cst_30 : f32 to vector<8x128xf32>
    %85 = arith.addf %84, %83 : vector<8x128xf32>
    %86 = arith.divf %84, %85 : vector<8x128xf32>
    %87 = vector.extract_strided_slice %10 {offsets = [16, 0], sizes = [8, 128], strides = [1, 1]} : vector<64x128xf32> to vector<8x128xf32>
    %88 = arith.addf %87, %78 : vector<8x128xf32>
    %89 = arith.negf %88 : vector<8x128xf32>
    %90 = math.exp %89 : vector<8x128xf32>
    %cst_31 = arith.constant 1.000000e+00 : f32
    %91 = vector.broadcast %cst_31 : f32 to vector<8x128xf32>
    %92 = arith.addf %91, %90 : vector<8x128xf32>
    %93 = arith.divf %91, %92 : vector<8x128xf32>
    %94 = vector.extract_strided_slice %15 {offsets = [16, 0], sizes = [8, 128], strides = [1, 1]} : vector<64x128xf32> to vector<8x128xf32>
    %95 = arith.addf %79, %21 : vector<8x128xf32>
    %96 = arith.mulf %86, %95 : vector<8x128xf32>
    %97 = arith.addf %94, %96 : vector<8x128xf32>
    %98 = math.tanh %97 : vector<8x128xf32>
    %cst_32 = arith.constant 1.000000e+00 : f32
    %99 = vector.broadcast %cst_32 : f32 to vector<8x128xf32>
    %100 = arith.subf %99, %93 : vector<8x128xf32>
    %101 = arith.mulf %100, %98 : vector<8x128xf32>
    %102 = arith.mulf %93, %76 : vector<8x128xf32>
    %103 = arith.addf %101, %102 : vector<8x128xf32>
    %cst_33 = arith.constant dense<0.000000e+00> : vector<8x128xf32>
    %104 = tpu.matmul %103, %16, %cst_33 {dimension_numbers = #tpu.dot_dimension_numbers<[1], [0], [0], [1], [0, 0, 1, 1], [], []>} : vector<8x128xf32>, vector<128x128xf32>, vector<8x128xf32> -> vector<8x128xf32>
    %cst_34 = arith.constant dense<0.000000e+00> : vector<8x128xf32>
    %105 = tpu.matmul %103, %17, %cst_34 {dimension_numbers = #tpu.dot_dimension_numbers<[1], [0], [0], [1], [0, 0, 1, 1], [], []>} : vector<8x128xf32>, vector<128x128xf32>, vector<8x128xf32> -> vector<8x128xf32>
    %cst_35 = arith.constant dense<0.000000e+00> : vector<8x128xf32>
    %106 = tpu.matmul %103, %18, %cst_35 {dimension_numbers = #tpu.dot_dimension_numbers<[1], [0], [0], [1], [0, 0, 1, 1], [], []>} : vector<8x128xf32>, vector<128x128xf32>, vector<8x128xf32> -> vector<8x128xf32>
    %107 = vector.extract_strided_slice %5 {offsets = [24, 0], sizes = [8, 128], strides = [1, 1]} : vector<64x128xf32> to vector<8x128xf32>
    %108 = arith.addf %107, %104 : vector<8x128xf32>
    %109 = arith.negf %108 : vector<8x128xf32>
    %110 = math.exp %109 : vector<8x128xf32>
    %cst_36 = arith.constant 1.000000e+00 : f32
    %111 = vector.broadcast %cst_36 : f32 to vector<8x128xf32>
    %112 = arith.addf %111, %110 : vector<8x128xf32>
    %113 = arith.divf %111, %112 : vector<8x128xf32>
    %114 = vector.extract_strided_slice %10 {offsets = [24, 0], sizes = [8, 128], strides = [1, 1]} : vector<64x128xf32> to vector<8x128xf32>
    %115 = arith.addf %114, %105 : vector<8x128xf32>
    %116 = arith.negf %115 : vector<8x128xf32>
    %117 = math.exp %116 : vector<8x128xf32>
    %cst_37 = arith.constant 1.000000e+00 : f32
    %118 = vector.broadcast %cst_37 : f32 to vector<8x128xf32>
    %119 = arith.addf %118, %117 : vector<8x128xf32>
    %120 = arith.divf %118, %119 : vector<8x128xf32>
    %121 = vector.extract_strided_slice %15 {offsets = [24, 0], sizes = [8, 128], strides = [1, 1]} : vector<64x128xf32> to vector<8x128xf32>
    %122 = arith.addf %106, %21 : vector<8x128xf32>
    %123 = arith.mulf %113, %122 : vector<8x128xf32>
    %124 = arith.addf %121, %123 : vector<8x128xf32>
    %125 = math.tanh %124 : vector<8x128xf32>
    %cst_38 = arith.constant 1.000000e+00 : f32
    %126 = vector.broadcast %cst_38 : f32 to vector<8x128xf32>
    %127 = arith.subf %126, %120 : vector<8x128xf32>
    %128 = arith.mulf %127, %125 : vector<8x128xf32>
    %129 = arith.mulf %120, %103 : vector<8x128xf32>
    %130 = arith.addf %128, %129 : vector<8x128xf32>
    %cst_39 = arith.constant dense<0.000000e+00> : vector<8x128xf32>
    %131 = tpu.matmul %130, %16, %cst_39 {dimension_numbers = #tpu.dot_dimension_numbers<[1], [0], [0], [1], [0, 0, 1, 1], [], []>} : vector<8x128xf32>, vector<128x128xf32>, vector<8x128xf32> -> vector<8x128xf32>
    %cst_40 = arith.constant dense<0.000000e+00> : vector<8x128xf32>
    %132 = tpu.matmul %130, %17, %cst_40 {dimension_numbers = #tpu.dot_dimension_numbers<[1], [0], [0], [1], [0, 0, 1, 1], [], []>} : vector<8x128xf32>, vector<128x128xf32>, vector<8x128xf32> -> vector<8x128xf32>
    %cst_41 = arith.constant dense<0.000000e+00> : vector<8x128xf32>
    %133 = tpu.matmul %130, %18, %cst_41 {dimension_numbers = #tpu.dot_dimension_numbers<[1], [0], [0], [1], [0, 0, 1, 1], [], []>} : vector<8x128xf32>, vector<128x128xf32>, vector<8x128xf32> -> vector<8x128xf32>
    %134 = vector.extract_strided_slice %5 {offsets = [32, 0], sizes = [8, 128], strides = [1, 1]} : vector<64x128xf32> to vector<8x128xf32>
    %135 = arith.addf %134, %131 : vector<8x128xf32>
    %136 = arith.negf %135 : vector<8x128xf32>
    %137 = math.exp %136 : vector<8x128xf32>
    %cst_42 = arith.constant 1.000000e+00 : f32
    %138 = vector.broadcast %cst_42 : f32 to vector<8x128xf32>
    %139 = arith.addf %138, %137 : vector<8x128xf32>
    %140 = arith.divf %138, %139 : vector<8x128xf32>
    %141 = vector.extract_strided_slice %10 {offsets = [32, 0], sizes = [8, 128], strides = [1, 1]} : vector<64x128xf32> to vector<8x128xf32>
    %142 = arith.addf %141, %132 : vector<8x128xf32>
    %143 = arith.negf %142 : vector<8x128xf32>
    %144 = math.exp %143 : vector<8x128xf32>
    %cst_43 = arith.constant 1.000000e+00 : f32
    %145 = vector.broadcast %cst_43 : f32 to vector<8x128xf32>
    %146 = arith.addf %145, %144 : vector<8x128xf32>
    %147 = arith.divf %145, %146 : vector<8x128xf32>
    %148 = vector.extract_strided_slice %15 {offsets = [32, 0], sizes = [8, 128], strides = [1, 1]} : vector<64x128xf32> to vector<8x128xf32>
    %149 = arith.addf %133, %21 : vector<8x128xf32>
    %150 = arith.mulf %140, %149 : vector<8x128xf32>
    %151 = arith.addf %148, %150 : vector<8x128xf32>
    %152 = math.tanh %151 : vector<8x128xf32>
    %cst_44 = arith.constant 1.000000e+00 : f32
    %153 = vector.broadcast %cst_44 : f32 to vector<8x128xf32>
    %154 = arith.subf %153, %147 : vector<8x128xf32>
    %155 = arith.mulf %154, %152 : vector<8x128xf32>
    %156 = arith.mulf %147, %130 : vector<8x128xf32>
    %157 = arith.addf %155, %156 : vector<8x128xf32>
    %cst_45 = arith.constant dense<0.000000e+00> : vector<8x128xf32>
    %158 = tpu.matmul %157, %16, %cst_45 {dimension_numbers = #tpu.dot_dimension_numbers<[1], [0], [0], [1], [0, 0, 1, 1], [], []>} : vector<8x128xf32>, vector<128x128xf32>, vector<8x128xf32> -> vector<8x128xf32>
    %cst_46 = arith.constant dense<0.000000e+00> : vector<8x128xf32>
    %159 = tpu.matmul %157, %17, %cst_46 {dimension_numbers = #tpu.dot_dimension_numbers<[1], [0], [0], [1], [0, 0, 1, 1], [], []>} : vector<8x128xf32>, vector<128x128xf32>, vector<8x128xf32> -> vector<8x128xf32>
    %cst_47 = arith.constant dense<0.000000e+00> : vector<8x128xf32>
    %160 = tpu.matmul %157, %18, %cst_47 {dimension_numbers = #tpu.dot_dimension_numbers<[1], [0], [0], [1], [0, 0, 1, 1], [], []>} : vector<8x128xf32>, vector<128x128xf32>, vector<8x128xf32> -> vector<8x128xf32>
    %161 = vector.extract_strided_slice %5 {offsets = [40, 0], sizes = [8, 128], strides = [1, 1]} : vector<64x128xf32> to vector<8x128xf32>
    %162 = arith.addf %161, %158 : vector<8x128xf32>
    %163 = arith.negf %162 : vector<8x128xf32>
    %164 = math.exp %163 : vector<8x128xf32>
    %cst_48 = arith.constant 1.000000e+00 : f32
    %165 = vector.broadcast %cst_48 : f32 to vector<8x128xf32>
    %166 = arith.addf %165, %164 : vector<8x128xf32>
    %167 = arith.divf %165, %166 : vector<8x128xf32>
    %168 = vector.extract_strided_slice %10 {offsets = [40, 0], sizes = [8, 128], strides = [1, 1]} : vector<64x128xf32> to vector<8x128xf32>
    %169 = arith.addf %168, %159 : vector<8x128xf32>
    %170 = arith.negf %169 : vector<8x128xf32>
    %171 = math.exp %170 : vector<8x128xf32>
    %cst_49 = arith.constant 1.000000e+00 : f32
    %172 = vector.broadcast %cst_49 : f32 to vector<8x128xf32>
    %173 = arith.addf %172, %171 : vector<8x128xf32>
    %174 = arith.divf %172, %173 : vector<8x128xf32>
    %175 = vector.extract_strided_slice %15 {offsets = [40, 0], sizes = [8, 128], strides = [1, 1]} : vector<64x128xf32> to vector<8x128xf32>
    %176 = arith.addf %160, %21 : vector<8x128xf32>
    %177 = arith.mulf %167, %176 : vector<8x128xf32>
    %178 = arith.addf %175, %177 : vector<8x128xf32>
    %179 = math.tanh %178 : vector<8x128xf32>
    %cst_50 = arith.constant 1.000000e+00 : f32
    %180 = vector.broadcast %cst_50 : f32 to vector<8x128xf32>
    %181 = arith.subf %180, %174 : vector<8x128xf32>
    %182 = arith.mulf %181, %179 : vector<8x128xf32>
    %183 = arith.mulf %174, %157 : vector<8x128xf32>
    %184 = arith.addf %182, %183 : vector<8x128xf32>
    %cst_51 = arith.constant dense<0.000000e+00> : vector<8x128xf32>
    %185 = tpu.matmul %184, %16, %cst_51 {dimension_numbers = #tpu.dot_dimension_numbers<[1], [0], [0], [1], [0, 0, 1, 1], [], []>} : vector<8x128xf32>, vector<128x128xf32>, vector<8x128xf32> -> vector<8x128xf32>
    %cst_52 = arith.constant dense<0.000000e+00> : vector<8x128xf32>
    %186 = tpu.matmul %184, %17, %cst_52 {dimension_numbers = #tpu.dot_dimension_numbers<[1], [0], [0], [1], [0, 0, 1, 1], [], []>} : vector<8x128xf32>, vector<128x128xf32>, vector<8x128xf32> -> vector<8x128xf32>
    %cst_53 = arith.constant dense<0.000000e+00> : vector<8x128xf32>
    %187 = tpu.matmul %184, %18, %cst_53 {dimension_numbers = #tpu.dot_dimension_numbers<[1], [0], [0], [1], [0, 0, 1, 1], [], []>} : vector<8x128xf32>, vector<128x128xf32>, vector<8x128xf32> -> vector<8x128xf32>
    %188 = vector.extract_strided_slice %5 {offsets = [48, 0], sizes = [8, 128], strides = [1, 1]} : vector<64x128xf32> to vector<8x128xf32>
    %189 = arith.addf %188, %185 : vector<8x128xf32>
    %190 = arith.negf %189 : vector<8x128xf32>
    %191 = math.exp %190 : vector<8x128xf32>
    %cst_54 = arith.constant 1.000000e+00 : f32
    %192 = vector.broadcast %cst_54 : f32 to vector<8x128xf32>
    %193 = arith.addf %192, %191 : vector<8x128xf32>
    %194 = arith.divf %192, %193 : vector<8x128xf32>
    %195 = vector.extract_strided_slice %10 {offsets = [48, 0], sizes = [8, 128], strides = [1, 1]} : vector<64x128xf32> to vector<8x128xf32>
    %196 = arith.addf %195, %186 : vector<8x128xf32>
    %197 = arith.negf %196 : vector<8x128xf32>
    %198 = math.exp %197 : vector<8x128xf32>
    %cst_55 = arith.constant 1.000000e+00 : f32
    %199 = vector.broadcast %cst_55 : f32 to vector<8x128xf32>
    %200 = arith.addf %199, %198 : vector<8x128xf32>
    %201 = arith.divf %199, %200 : vector<8x128xf32>
    %202 = vector.extract_strided_slice %15 {offsets = [48, 0], sizes = [8, 128], strides = [1, 1]} : vector<64x128xf32> to vector<8x128xf32>
    %203 = arith.addf %187, %21 : vector<8x128xf32>
    %204 = arith.mulf %194, %203 : vector<8x128xf32>
    %205 = arith.addf %202, %204 : vector<8x128xf32>
    %206 = math.tanh %205 : vector<8x128xf32>
    %cst_56 = arith.constant 1.000000e+00 : f32
    %207 = vector.broadcast %cst_56 : f32 to vector<8x128xf32>
    %208 = arith.subf %207, %201 : vector<8x128xf32>
    %209 = arith.mulf %208, %206 : vector<8x128xf32>
    %210 = arith.mulf %201, %184 : vector<8x128xf32>
    %211 = arith.addf %209, %210 : vector<8x128xf32>
    %cst_57 = arith.constant dense<0.000000e+00> : vector<8x128xf32>
    %212 = tpu.matmul %211, %16, %cst_57 {dimension_numbers = #tpu.dot_dimension_numbers<[1], [0], [0], [1], [0, 0, 1, 1], [], []>} : vector<8x128xf32>, vector<128x128xf32>, vector<8x128xf32> -> vector<8x128xf32>
    %cst_58 = arith.constant dense<0.000000e+00> : vector<8x128xf32>
    %213 = tpu.matmul %211, %17, %cst_58 {dimension_numbers = #tpu.dot_dimension_numbers<[1], [0], [0], [1], [0, 0, 1, 1], [], []>} : vector<8x128xf32>, vector<128x128xf32>, vector<8x128xf32> -> vector<8x128xf32>
    %cst_59 = arith.constant dense<0.000000e+00> : vector<8x128xf32>
    %214 = tpu.matmul %211, %18, %cst_59 {dimension_numbers = #tpu.dot_dimension_numbers<[1], [0], [0], [1], [0, 0, 1, 1], [], []>} : vector<8x128xf32>, vector<128x128xf32>, vector<8x128xf32> -> vector<8x128xf32>
    %215 = vector.extract_strided_slice %5 {offsets = [56, 0], sizes = [8, 128], strides = [1, 1]} : vector<64x128xf32> to vector<8x128xf32>
    %216 = arith.addf %215, %212 : vector<8x128xf32>
    %217 = arith.negf %216 : vector<8x128xf32>
    %218 = math.exp %217 : vector<8x128xf32>
    %cst_60 = arith.constant 1.000000e+00 : f32
    %219 = vector.broadcast %cst_60 : f32 to vector<8x128xf32>
    %220 = arith.addf %219, %218 : vector<8x128xf32>
    %221 = arith.divf %219, %220 : vector<8x128xf32>
    %222 = vector.extract_strided_slice %10 {offsets = [56, 0], sizes = [8, 128], strides = [1, 1]} : vector<64x128xf32> to vector<8x128xf32>
    %223 = arith.addf %222, %213 : vector<8x128xf32>
    %224 = arith.negf %223 : vector<8x128xf32>
    %225 = math.exp %224 : vector<8x128xf32>
    %cst_61 = arith.constant 1.000000e+00 : f32
    %226 = vector.broadcast %cst_61 : f32 to vector<8x128xf32>
    %227 = arith.addf %226, %225 : vector<8x128xf32>
    %228 = arith.divf %226, %227 : vector<8x128xf32>
    %229 = vector.extract_strided_slice %15 {offsets = [56, 0], sizes = [8, 128], strides = [1, 1]} : vector<64x128xf32> to vector<8x128xf32>
    %230 = arith.addf %214, %21 : vector<8x128xf32>
    %231 = arith.mulf %221, %230 : vector<8x128xf32>
    %232 = arith.addf %229, %231 : vector<8x128xf32>
    %233 = math.tanh %232 : vector<8x128xf32>
    %cst_62 = arith.constant 1.000000e+00 : f32
    %234 = vector.broadcast %cst_62 : f32 to vector<8x128xf32>
    %235 = arith.subf %234, %228 : vector<8x128xf32>
    %236 = arith.mulf %235, %233 : vector<8x128xf32>
    %237 = arith.mulf %228, %211 : vector<8x128xf32>
    %238 = arith.addf %236, %237 : vector<8x128xf32>
    %239 = vector.extract_strided_slice %0 {offsets = [56, 0], sizes = [8, 16], strides = [1, 1]} : vector<64x16xf32> to vector<8x16xf32>
    %c48 = arith.constant 48 : index
    %c0_63 = arith.constant 0 : index
    %240 = vector.load %arg1[%c48, %c0_63] : memref<808x128xf32, #tpu.memory_space<vmem>>, vector<16x128xf32>
    %cst_64 = arith.constant dense<0.000000e+00> : vector<8x128xf32>
    %241 = tpu.matmul %239, %240, %cst_64 {dimension_numbers = #tpu.dot_dimension_numbers<[1], [0], [0], [1], [0, 0, 1, 1], [], []>} : vector<8x16xf32>, vector<16x128xf32>, vector<8x128xf32> -> vector<8x128xf32>
    %c768 = arith.constant 768 : index
    %c0_65 = arith.constant 0 : index
    %242 = vector.load %arg1[%c768, %c0_65] : memref<808x128xf32, #tpu.memory_space<vmem>>, vector<1x128xf32>
    %243 = vector.broadcast %242 : vector<1x128xf32> to vector<8x128xf32>
    %244 = arith.addf %241, %243 : vector<8x128xf32>
    %c64 = arith.constant 64 : index
    %c0_66 = arith.constant 0 : index
    %245 = vector.load %arg1[%c64, %c0_66] : memref<808x128xf32, #tpu.memory_space<vmem>>, vector<16x128xf32>
    %cst_67 = arith.constant dense<0.000000e+00> : vector<8x128xf32>
    %246 = tpu.matmul %239, %245, %cst_67 {dimension_numbers = #tpu.dot_dimension_numbers<[1], [0], [0], [1], [0, 0, 1, 1], [], []>} : vector<8x16xf32>, vector<16x128xf32>, vector<8x128xf32> -> vector<8x128xf32>
    %c776 = arith.constant 776 : index
    %c0_68 = arith.constant 0 : index
    %247 = vector.load %arg1[%c776, %c0_68] : memref<808x128xf32, #tpu.memory_space<vmem>>, vector<1x128xf32>
    %248 = vector.broadcast %247 : vector<1x128xf32> to vector<8x128xf32>
    %249 = arith.addf %246, %248 : vector<8x128xf32>
    %c80 = arith.constant 80 : index
    %c0_69 = arith.constant 0 : index
    %250 = vector.load %arg1[%c80, %c0_69] : memref<808x128xf32, #tpu.memory_space<vmem>>, vector<16x128xf32>
    %cst_70 = arith.constant dense<0.000000e+00> : vector<8x128xf32>
    %251 = tpu.matmul %239, %250, %cst_70 {dimension_numbers = #tpu.dot_dimension_numbers<[1], [0], [0], [1], [0, 0, 1, 1], [], []>} : vector<8x16xf32>, vector<16x128xf32>, vector<8x128xf32> -> vector<8x128xf32>
    %c784 = arith.constant 784 : index
    %c0_71 = arith.constant 0 : index
    %252 = vector.load %arg1[%c784, %c0_71] : memref<808x128xf32, #tpu.memory_space<vmem>>, vector<1x128xf32>
    %253 = vector.broadcast %252 : vector<1x128xf32> to vector<8x128xf32>
    %254 = arith.addf %251, %253 : vector<8x128xf32>
    %255 = arith.negf %244 : vector<8x128xf32>
    %256 = math.exp %255 : vector<8x128xf32>
    %cst_72 = arith.constant 1.000000e+00 : f32
    %257 = vector.broadcast %cst_72 : f32 to vector<8x128xf32>
    %258 = arith.addf %257, %256 : vector<8x128xf32>
    %259 = arith.divf %257, %258 : vector<8x128xf32>
    %260 = arith.negf %249 : vector<8x128xf32>
    %261 = math.exp %260 : vector<8x128xf32>
    %cst_73 = arith.constant 1.000000e+00 : f32
    %262 = vector.broadcast %cst_73 : f32 to vector<8x128xf32>
    %263 = arith.addf %262, %261 : vector<8x128xf32>
    %264 = arith.divf %262, %263 : vector<8x128xf32>
    %c792 = arith.constant 792 : index
    %c0_74 = arith.constant 0 : index
    %265 = vector.load %arg1[%c792, %c0_74] : memref<808x128xf32, #tpu.memory_space<vmem>>, vector<1x128xf32>
    %266 = vector.broadcast %265 : vector<1x128xf32> to vector<8x128xf32>
    %267 = arith.mulf %259, %266 : vector<8x128xf32>
    %268 = arith.addf %254, %267 : vector<8x128xf32>
    %269 = math.tanh %268 : vector<8x128xf32>
    %cst_75 = arith.constant 1.000000e+00 : f32
    %270 = vector.broadcast %cst_75 : f32 to vector<8x128xf32>
    %271 = arith.subf %270, %264 : vector<8x128xf32>
    %272 = arith.mulf %271, %269 : vector<8x128xf32>
    %c480 = arith.constant 480 : index
    %c0_76 = arith.constant 0 : index
    %273 = vector.load %arg1[%c480, %c0_76] : memref<808x128xf32, #tpu.memory_space<vmem>>, vector<128x128xf32>
    %cst_77 = arith.constant dense<0.000000e+00> : vector<8x128xf32>
    %274 = tpu.matmul %238, %273, %cst_77 {dimension_numbers = #tpu.dot_dimension_numbers<[1], [0], [0], [1], [0, 0, 1, 1], [], []>} : vector<8x128xf32>, vector<128x128xf32>, vector<8x128xf32> -> vector<8x128xf32>
    %c608 = arith.constant 608 : index
    %c0_78 = arith.constant 0 : index
    %275 = vector.load %arg1[%c608, %c0_78] : memref<808x128xf32, #tpu.memory_space<vmem>>, vector<128x128xf32>
    %cst_79 = arith.constant dense<0.000000e+00> : vector<8x128xf32>
    %276 = tpu.matmul %272, %275, %cst_79 {dimension_numbers = #tpu.dot_dimension_numbers<[1], [0], [0], [1], [0, 0, 1, 1], [], []>} : vector<8x128xf32>, vector<128x128xf32>, vector<8x128xf32> -> vector<8x128xf32>
    %277 = arith.addf %274, %276 : vector<8x128xf32>
    %c800 = arith.constant 800 : index
    %c0_80 = arith.constant 0 : index
    %278 = vector.load %arg1[%c800, %c0_80] : memref<808x128xf32, #tpu.memory_space<vmem>>, vector<1x128xf32>
    %279 = vector.broadcast %278 : vector<1x128xf32> to vector<8x128xf32>
    %280 = arith.addf %277, %279 : vector<8x128xf32>
    %281 = math.tanh %280 : vector<8x128xf32>
    %c0_81 = arith.constant 0 : index
    %c0_82 = arith.constant 0 : index
    %282 = vector.load %arg2[%c0_81, %c0_82] : memref<8x128xf32, #tpu.memory_space<vmem>>, vector<8x128xf32>
    tpu.vector_store %arg2[%c0_81, %c0_82], %281 {strides = array<i32>} : memref<8x128xf32, #tpu.memory_space<vmem>>, vector<8x128xf32>,
    return
  }
}

</mosaic_0001>

<llo_original>
// kernel: forward.1
$region0: #{forward.1}
  #allocation0 [shape = 'u32[]', space=smem, size = 0x4, offset = 0x4, fixed_abs, tag = 'smem constant byte address 0x4 - core index']
  #allocation1 [shape = 'u32[72,128]{1,0:T(1,128)}', space=vmem, size = 0x9000, scoped, tag = 'internal scratch']
  %s0 = inlined_call_operand.vmem [shape: f32[64,16], index: 0, kind: input, shape index: {}]
  %s1 = inlined_call_operand.hbm [shape: f32[808,128], index: 1, kind: input, shape index: {}]
  %s2 = inlined_call_operand.vmem [shape: f32[8,128], index: 2, kind: output, shape index: {}]
  %s3 = sld [smem:[#allocation0]]
  $region22: #{forward.1} parent=0
    _
  %s5 = ssub.s32 1, %s3
  %s6 = scalar_select 0, %s5, %s3
  $region1: #{forward.1} parent=0
    #allocation2 [shape = 'u8[413696]{0}', space=vmem, size = 0x65000, scoped, tag = 'input window, operand 1, single buffered']
    #allocation3 [shape = 's32[1]{0}', space=sflag, size = 0x4, scoped, tag = 'scoped memory for forward.1']
    %7 = vsyncpa [#allocation3], 0
    // Predicated region
    $region2: #{forward.1} parent=1 // pred_check
      _
    $region3: #{forward.1} parent=1 // pred_check_branch
      %9 = sbr.rel (0) target = $region5
    $region4: #{forward.1} parent=1 // pred_region
      _
    $region5: #{forward.1} parent=1 // pred_fallthru
      _
    // Predicated region
    $region6: #{forward.1} parent=1 // pred_check
      _
    $region7: #{forward.1} parent=1 // pred_check_branch
      %11 = sbr.rel (0) target = $region9
    $region8: #{forward.1} parent=1 // pred_region
      %13 = vsyncadd [#allocation3], 0
      %s14 = sshll.u32 %s1, 4
      %s15 = int_to_ptr.hbm [resolvable:$true] %s14
      %s16 = sshll.u32 [#allocation2], 4
      %s17 = int_to_ptr.vmem [resolvable:$true] %s16
      %22 = dma.hbm_to_vmem [thread:$0]  %s15, 12928, %s17, [#allocation3], 128, 128, 8
    $region9: #{forward.1} parent=1 // pred_fallthru
      _
    // Predicated region
    $region10: #{forward.1} parent=1 // pred_check
      _
    $region11: #{forward.1} parent=1 // pred_check_branch
      %24 = sbr.rel (0) target = $region13
    $region12: #{forward.1} parent=1 // pred_region
      %26 = dma.done [#allocation3], 12928
    $region13: #{forward.1} parent=1 // pred_fallthru
      _
    %v27 = vld [vmem:[%s0] sm:$0xff]
    %v28 = vld [vmem:[%s0 + $0x8] sm:$0xff]
    %v29 = vld [vmem:[%s0 + $0x10] sm:$0xff]
    %v30 = vld [vmem:[%s0 + $0x18] sm:$0xff]
    %v31 = vld [vmem:[%s0 + $0x20] sm:$0xff]
    %v32 = vld [vmem:[%s0 + $0x28] sm:$0xff]
    %v33 = vld [vmem:[%s0 + $0x30] sm:$0xff]
    %v34 = vld [vmem:[%s0 + $0x38] sm:$0xff]
    %v35 = vld [vmem:[#allocation2] sm:$0xff]
    %v36 = vld [vmem:[#allocation2 + $0x8] sm:$0xff]
    %v37 = vld [vmem:[#allocation2 + $0x2e0] sm:$0x1]
    %v38 = vperm.slane %v37, 0
    %vm39 = vcmask 130048
    %v41 = vsel %vm39, %v27, 0
    %v44 = vsel %vm39, %v28, 0
    %v47 = vsel %vm39, %v29, 0
    %v50 = vsel %vm39, %v30, 0
    %v53 = vsel %vm39, %v31, 0
    %v56 = vsel %vm39, %v32, 0
    %v59 = vsel %vm39, %v33, 0
    %v62 = vsel %vm39, %v34, 0
    %64 = vmatpush.msra.mxu0 0.0
    %65 = vmatpush.msra.mxu0 0.0
    %66 = vmatpush.msra.mxu0 0.0
    %67 = vmatpush.msra.mxu0 0.0
    %68 = vmatpush.msra.mxu0 0.0
    %69 = vmatpush.msra.mxu0 0.0
    %70 = vmatpush.msra.mxu0 0.0
    %71 = vmatpush.msra.mxu0 0.0
    %72 = vmatpush.msra.mxu0 0.0
    %73 = vmatpush.msra.mxu0 0.0
    %74 = vmatpush.msra.mxu0 0.0
    %75 = vmatpush.msra.mxu0 0.0
    %76 = vmatpush.msra.mxu0 0.0
    %77 = vmatpush.msra.mxu0 0.0
    %78 = vmatpush.msra.mxu0 %v36
    %79 = vmatpush.msra.mxu0 %v35
    %80 = vmatmul.f32.gmra.mxu0 %v41
    %v81 = vpop.f32.mrf.mxu0
    %v82 = vadd.f32 %v38, %v81
    %83 = vmatmul.f32.gmra.mxu0 %v44
    %v84 = vpop.f32.mrf.mxu0
    %v85 = vadd.f32 %v38, %v84
    %86 = vmatmul.f32.gmra.mxu0 %v47
    %v87 = vpop.f32.mrf.mxu0
    %v88 = vadd.f32 %v38, %v87
    %89 = vmatmul.f32.gmra.mxu0 %v50
    %v90 = vpop.f32.mrf.mxu0
    %v91 = vadd.f32 %v38, %v90
    %92 = vmatmul.f32.gmra.mxu0 %v53
    %v93 = vpop.f32.mrf.mxu0
    %v94 = vadd.f32 %v38, %v93
    %95 = vmatmul.f32.gmra.mxu0 %v56
    %v96 = vpop.f32.mrf.mxu0
    %v97 = vadd.f32 %v38, %v96
    %98 = vmatmul.f32.gmra.mxu0 %v59
    %v99 = vpop.f32.mrf.mxu0
    %v100 = vadd.f32 %v38, %v99
    %101 = vmatmul.f32.gmra.mxu0 %v62
    %v102 = vpop.f32.mrf.mxu0
    %v103 = vadd.f32 %v38, %v102
    %104 = vdwg.mxu0
    %v105 = vld [vmem:[#allocation2 + $0x10] sm:$0xff]
    %v106 = vld [vmem:[#allocation2 + $0x18] sm:$0xff]
    %v107 = vld [vmem:[#allocation2 + $0x2e8] sm:$0x1]
    %v108 = vperm.slane %v107, 0
    %109 = vmatpush.msra.mxu0 0.0
    %110 = vmatpush.msra.mxu0 0.0
    %111 = vmatpush.msra.mxu0 0.0
    %112 = vmatpush.msra.mxu0 0.0
    %113 = vmatpush.msra.mxu0 0.0
    %114 = vmatpush.msra.mxu0 0.0
    %115 = vmatpush.msra.mxu0 0.0
    %116 = vmatpush.msra.mxu0 0.0
    %117 = vmatpush.msra.mxu0 0.0
    %118 = vmatpush.msra.mxu0 0.0
    %119 = vmatpush.msra.mxu0 0.0
    %120 = vmatpush.msra.mxu0 0.0
    %121 = vmatpush.msra.mxu0 0.0
    %122 = vmatpush.msra.mxu0 0.0
    %123 = vmatpush.msra.mxu0 %v106
    %124 = vmatpush.msra.mxu0 %v105
    %125 = vmatmul.f32.gmra.mxu0 %v41
    %v126 = vpop.f32.mrf.mxu0
    %v127 = vadd.f32 %v108, %v126
    %128 = vmatmul.f32.gmra.mxu0 %v44
    %v129 = vpop.f32.mrf.mxu0
    %v130 = vadd.f32 %v108, %v129
    %131 = vmatmul.f32.gmra.mxu0 %v47
    %v132 = vpop.f32.mrf.mxu0
    %v133 = vadd.f32 %v108, %v132
    %134 = vmatmul.f32.gmra.mxu0 %v50
    %v135 = vpop.f32.mrf.mxu0
    %v136 = vadd.f32 %v108, %v135
    %137 = vmatmul.f32.gmra.mxu0 %v53
    %v138 = vpop.f32.mrf.mxu0
    %v139 = vadd.f32 %v108, %v138
    %140 = vmatmul.f32.gmra.mxu0 %v56
    %v141 = vpop.f32.mrf.mxu0
    %v142 = vadd.f32 %v108, %v141
    %143 = vmatmul.f32.gmra.mxu0 %v59
    %v144 = vpop.f32.mrf.mxu0
    %v145 = vadd.f32 %v108, %v144
    %146 = vmatmul.f32.gmra.mxu0 %v62
    %v147 = vpop.f32.mrf.mxu0
    %v148 = vadd.f32 %v108, %v147
    %149 = vdwg.mxu0
    %v150 = vld [vmem:[#allocation2 + $0x20] sm:$0xff]
    %v151 = vld [vmem:[#allocation2 + $0x28] sm:$0xff]
    %v152 = vld [vmem:[#allocation2 + $0x2f0] sm:$0x1]
    %v153 = vperm.slane %v152, 0
    %154 = vmatpush.msra.mxu0 0.0
    %155 = vmatpush.msra.mxu0 0.0
    %156 = vmatpush.msra.mxu0 0.0
    %157 = vmatpush.msra.mxu0 0.0
    %158 = vmatpush.msra.mxu0 0.0
    %159 = vmatpush.msra.mxu0 0.0
    %160 = vmatpush.msra.mxu0 0.0
    %161 = vmatpush.msra.mxu0 0.0
    %162 = vmatpush.msra.mxu0 0.0
    %163 = vmatpush.msra.mxu0 0.0
    %164 = vmatpush.msra.mxu0 0.0
    %165 = vmatpush.msra.mxu0 0.0
    %166 = vmatpush.msra.mxu0 0.0
    %167 = vmatpush.msra.mxu0 0.0
    %168 = vmatpush.msra.mxu0 %v151
    %169 = vmatpush.msra.mxu0 %v150
    %170 = vmatmul.f32.gmra.mxu0 %v41
    %v171 = vpop.f32.mrf.mxu0
    %v172 = vadd.f32 %v153, %v171
    %173 = vmatmul.f32.gmra.mxu0 %v44
    %v174 = vpop.f32.mrf.mxu0
    %v175 = vadd.f32 %v153, %v174
    %176 = vmatmul.f32.gmra.mxu0 %v47
    %v177 = vpop.f32.mrf.mxu0
    %v178 = vadd.f32 %v153, %v177
    %179 = vmatmul.f32.gmra.mxu0 %v50
    %v180 = vpop.f32.mrf.mxu0
    %v181 = vadd.f32 %v153, %v180
    %182 = vmatmul.f32.gmra.mxu0 %v53
    %v183 = vpop.f32.mrf.mxu0
    %v184 = vadd.f32 %v153, %v183
    %185 = vmatmul.f32.gmra.mxu0 %v56
    %v186 = vpop.f32.mrf.mxu0
    %v187 = vadd.f32 %v153, %v186
    %188 = vmatmul.f32.gmra.mxu0 %v59
    %v189 = vpop.f32.mrf.mxu0
    %v190 = vadd.f32 %v153, %v189
    %191 = vmatmul.f32.gmra.mxu0 %v62
    %v192 = vpop.f32.mrf.mxu0
    %v193 = vadd.f32 %v153, %v192
    %194 = vdwg.mxu0
    %v195 = vld [vmem:[#allocation2 + $0x60] sm:$0xff]
    %v196 = vld [vmem:[#allocation2 + $0x68] sm:$0xff]
    %v197 = vld [vmem:[#allocation2 + $0x70] sm:$0xff]
    %v198 = vld [vmem:[#allocation2 + $0x78] sm:$0xff]
    %v199 = vld [vmem:[#allocation2 + $0x80] sm:$0xff]
    %v200 = vld [vmem:[#allocation2 + $0x88] sm:$0xff]
    %v201 = vld [vmem:[#allocation2 + $0x90] sm:$0xff]
    %v202 = vld [vmem:[#allocation2 + $0x98] sm:$0xff]
    %v203 = vld [vmem:[#allocation2 + $0xa0] sm:$0xff]
    %v204 = vld [vmem:[#allocation2 + $0xa8] sm:$0xff]
    %v205 = vld [vmem:[#allocation2 + $0xb0] sm:$0xff]
    %v206 = vld [vmem:[#allocation2 + $0xb8] sm:$0xff]
    %v207 = vld [vmem:[#allocation2 + $0xc0] sm:$0xff]
    %v208 = vld [vmem:[#allocation2 + $0xc8] sm:$0xff]
    %v209 = vld [vmem:[#allocation2 + $0xd0] sm:$0xff]
    %v210 = vld [vmem:[#allocation2 + $0xd8] sm:$0xff]
    %v211 = vld [vmem:[#allocation2 + $0xe0] sm:$0xff]
    %v212 = vld [vmem:[#allocation2 + $0xe8] sm:$0xff]
    %v213 = vld [vmem:[#allocation2 + $0xf0] sm:$0xff]
    %v214 = vld [vmem:[#allocation2 + $0xf8] sm:$0xff]
    %v215 = vld [vmem:[#allocation2 + $0x100] sm:$0xff]
    %v216 = vld [vmem:[#allocation2 + $0x108] sm:$0xff]
    %v217 = vld [vmem:[#allocation2 + $0x110] sm:$0xff]
    %v218 = vld [vmem:[#allocation2 + $0x118] sm:$0xff]
    %v219 = vld [vmem:[#allocation2 + $0x120] sm:$0xff]
    %v220 = vld [vmem:[#allocation2 + $0x128] sm:$0xff]
    %v221 = vld [vmem:[#allocation2 + $0x130] sm:$0xff]
    %v222 = vld [vmem:[#allocation2 + $0x138] sm:$0xff]
    %v223 = vld [vmem:[#allocation2 + $0x140] sm:$0xff]
    %v224 = vld [vmem:[#allocation2 + $0x148] sm:$0xff]
    %v225 = vld [vmem:[#allocation2 + $0x150] sm:$0xff]
    %v226 = vld [vmem:[#allocation2 + $0x158] sm:$0xff]
    %v227 = vld [vmem:[#allocation2 + $0x160] sm:$0xff]
    %v228 = vld [vmem:[#allocation2 + $0x168] sm:$0xff]
    %v229 = vld [vmem:[#allocation2 + $0x170] sm:$0xff]
    %v230 = vld [vmem:[#allocation2 + $0x178] sm:$0xff]
    %v231 = vld [vmem:[#allocation2 + $0x180] sm:$0xff]
    %v232 = vld [vmem:[#allocation2 + $0x188] sm:$0xff]
    %v233 = vld [vmem:[#allocation2 + $0x190] sm:$0xff]
    %v234 = vld [vmem:[#allocation2 + $0x198] sm:$0xff]
    %v235 = vld [vmem:[#allocation2 + $0x1a0] sm:$0xff]
    %v236 = vld [vmem:[#allocation2 + $0x1a8] sm:$0xff]
    %v237 = vld [vmem:[#allocation2 + $0x1b0] sm:$0xff]
    %v238 = vld [vmem:[#allocation2 + $0x1b8] sm:$0xff]
    %v239 = vld [vmem:[#allocation2 + $0x1c0] sm:$0xff]
    %v240 = vld [vmem:[#allocation2 + $0x1c8] sm:$0xff]
    %v241 = vld [vmem:[#allocation2 + $0x1d0] sm:$0xff]
    %v242 = vld [vmem:[#allocation2 + $0x1d8] sm:$0xff]
    %v243 = vld [vmem:[#allocation2 + $0x2f8] sm:$0x1]
    %v244 = vperm.slane %v243, 0
    %245 = vmatpush.msra.mxu0 %v210
    %246 = vmatpush.msra.mxu0 %v209
    %247 = vmatpush.msra.mxu0 %v208
    %248 = vmatpush.msra.mxu0 %v207
    %249 = vmatpush.msra.mxu0 %v206
    %250 = vmatpush.msra.mxu0 %v205
    %251 = vmatpush.msra.mxu0 %v204
    %252 = vmatpush.msra.mxu0 %v203
    %253 = vmatpush.msra.mxu0 %v202
    %254 = vmatpush.msra.mxu0 %v201
    %255 = vmatpush.msra.mxu0 %v200
    %256 = vmatpush.msra.mxu0 %v199
    %257 = vmatpush.msra.mxu0 %v198
    %258 = vmatpush.msra.mxu0 %v197
    %259 = vmatpush.msra.mxu0 %v196
    %260 = vmatpush.msra.mxu0 %v195
    %261 = vmatmul.f32.gmra.mxu0 0.0
    %v262 = vpop.f32.mrf.mxu0
    %v263 = vadd.f32 0.0, %v262
    %264 = vdwg.mxu0
    %265 = vmatpush.msra.mxu0 %v226
    %266 = vmatpush.msra.mxu0 %v225
    %267 = vmatpush.msra.mxu0 %v224
    %268 = vmatpush.msra.mxu0 %v223
    %269 = vmatpush.msra.mxu0 %v222
    %270 = vmatpush.msra.mxu0 %v221
    %271 = vmatpush.msra.mxu0 %v220
    %272 = vmatpush.msra.mxu0 %v219
    %273 = vmatpush.msra.mxu0 %v218
    %274 = vmatpush.msra.mxu0 %v217
    %275 = vmatpush.msra.mxu0 %v216
    %276 = vmatpush.msra.mxu0 %v215
    %277 = vmatpush.msra.mxu0 %v214
    %278 = vmatpush.msra.mxu0 %v213
    %279 = vmatpush.msra.mxu0 %v212
    %280 = vmatpush.msra.mxu0 %v211
    %281 = vmatmul.f32.gmra.mxu0 0.0
    %v282 = vpop.f32.mrf.mxu0
    %v283 = vadd.f32 0.0, %v282
    %284 = vdwg.mxu0
    %v285 = vadd.f32 %v82, %v263
    %v286 = vxor.u32 %v285, 2147483648
    %v287 = vmul.f32 %v286, 1.442695
    %v288 = vpow.pop %v287
    %v289 = vadd.f32 %v288, 1.0
    %v290 = vrcp.pop %v289
    %v291 = vmul.f32 %v289, %v290
    %v292 = vsub.f32 1.0, %v291
    %v293 = vmul.f32 %v290, %v292
    %v294 = vadd.f32 %v290, %v293
    %vm295 = vweird.f32 %v289
    %vm296 = vweird.f32 %v290
    %vm297 = vmor %vm295, %vm296
    %v298 = vsel %vm297, %v290, %v294
    %v299 = vand.u32 2147483647, %v289
    %vm300 = vcmp.eq.f32.partialorder %v299, 8.507059e+37
    %v301 = vand.u32 %v289, 2147483648
    %v302 = vor.u32 1.1754944e-38, %v301
    %v303 = vsel %vm300, %v302, %v298
    %v304 = vmul.f32 1.0, %v303
    %v305 = vadd.f32 %v127, %v283
    %v306 = vxor.u32 %v305, 2147483648
    %v307 = vmul.f32 %v306, 1.442695
    %v308 = vpow.pop %v307
    %v309 = vadd.f32 %v308, 1.0
    %v310 = vrcp.pop %v309
    %v311 = vmul.f32 %v309, %v310
    %v312 = vsub.f32 1.0, %v311
    %v313 = vmul.f32 %v310, %v312
    %v314 = vadd.f32 %v310, %v313
    %vm315 = vweird.f32 %v309
    %vm316 = vweird.f32 %v310
    %vm317 = vmor %vm315, %vm316
    %v318 = vsel %vm317, %v310, %v314
    %v319 = vand.u32 2147483647, %v309
    %vm320 = vcmp.eq.f32.partialorder %v319, 8.507059e+37
    %v321 = vand.u32 %v309, 2147483648
    %v322 = vor.u32 1.1754944e-38, %v321
    %v323 = vsel %vm320, %v322, %v318
    %v324 = vmul.f32 1.0, %v323
    %325 = vmatpush.msra.mxu0 %v242
    %326 = vmatpush.msra.mxu0 %v241
    %327 = vmatpush.msra.mxu0 %v240
    %328 = vmatpush.msra.mxu0 %v239
    %329 = vmatpush.msra.mxu0 %v238
    %330 = vmatpush.msra.mxu0 %v237
    %331 = vmatpush.msra.mxu0 %v236
    %332 = vmatpush.msra.mxu0 %v235
    %333 = vmatpush.msra.mxu0 %v234
    %334 = vmatpush.msra.mxu0 %v233
    %335 = vmatpush.msra.mxu0 %v232
    %336 = vmatpush.msra.mxu0 %v231
    %337 = vmatpush.msra.mxu0 %v230
    %338 = vmatpush.msra.mxu0 %v229
    %339 = vmatpush.msra.mxu0 %v228
    %340 = vmatpush.msra.mxu0 %v227
    %341 = vmatmul.f32.gmra.mxu0 0.0
    %v342 = vpop.f32.mrf.mxu0
    %v343 = vadd.f32 %v244, %v342
    %344 = vdwg.mxu0
    %v345 = vmul.f32 %v304, %v343
    %v346 = vadd.f32 %v172, %v345
    %v347 = vtanh.pop %v346
    %v348 = vsub.f32 1.0, %v324
    %v349 = vmul.f32 %v348, %v347
    %v350 = vmul.f32 %v324, 0.0
    %v351 = vadd.f32 %v349, %v350
    %352 = vmatpush.msra.mxu0 %v210
    %353 = vmatpush.msra.mxu0 %v209
    %354 = vmatpush.msra.mxu0 %v208
    %355 = vmatpush.msra.mxu0 %v207
    %356 = vmatpush.msra.mxu0 %v206
    %357 = vmatpush.msra.mxu0 %v205
    %358 = vmatpush.msra.mxu0 %v204
    %359 = vmatpush.msra.mxu0 %v203
    %360 = vmatpush.msra.mxu0 %v202
    %361 = vmatpush.msra.mxu0 %v201
    %362 = vmatpush.msra.mxu0 %v200
    %363 = vmatpush.msra.mxu0 %v199
    %364 = vmatpush.msra.mxu0 %v198
    %365 = vmatpush.msra.mxu0 %v197
    %366 = vmatpush.msra.mxu0 %v196
    %367 = vmatpush.msra.mxu0 %v195
    %368 = vmatmul.f32.gmra.mxu0 %v351
    %v369 = vpop.f32.mrf.mxu0
    %v370 = vadd.f32 0.0, %v369
    %371 = vdwg.mxu0
    %372 = vmatpush.msra.mxu0 %v226
    %373 = vmatpush.msra.mxu0 %v225
    %374 = vmatpush.msra.mxu0 %v224
    %375 = vmatpush.msra.mxu0 %v223
    %376 = vmatpush.msra.mxu0 %v222
    %377 = vmatpush.msra.mxu0 %v221
    %378 = vmatpush.msra.mxu0 %v220
    %379 = vmatpush.msra.mxu0 %v219
    %380 = vmatpush.msra.mxu0 %v218
    %381 = vmatpush.msra.mxu0 %v217
    %382 = vmatpush.msra.mxu0 %v216
    %383 = vmatpush.msra.mxu0 %v215
    %384 = vmatpush.msra.mxu0 %v214
    %385 = vmatpush.msra.mxu0 %v213
    %386 = vmatpush.msra.mxu0 %v212
    %387 = vmatpush.msra.mxu0 %v211
    %388 = vmatmul.f32.gmra.mxu0 %v351
    %v389 = vpop.f32.mrf.mxu0
    %v390 = vadd.f32 0.0, %v389
    %391 = vdwg.mxu0
    %v392 = vadd.f32 %v85, %v370
    %v393 = vxor.u32 %v392, 2147483648
    %v394 = vmul.f32 %v393, 1.442695
    %v395 = vpow.pop %v394
    %v396 = vadd.f32 %v395, 1.0
    %v397 = vrcp.pop %v396
    %v398 = vmul.f32 %v396, %v397
    %v399 = vsub.f32 1.0, %v398
    %v400 = vmul.f32 %v397, %v399
    %v401 = vadd.f32 %v397, %v400
    %vm402 = vweird.f32 %v396
    %vm403 = vweird.f32 %v397
    %vm404 = vmor %vm402, %vm403
    %v405 = vsel %vm404, %v397, %v401
    %v406 = vand.u32 2147483647, %v396
    %vm407 = vcmp.eq.f32.partialorder %v406, 8.507059e+37
    %v408 = vand.u32 %v396, 2147483648
    %v409 = vor.u32 1.1754944e-38, %v408
    %v410 = vsel %vm407, %v409, %v405
    %v411 = vmul.f32 1.0, %v410
    %v412 = vadd.f32 %v130, %v390
    %v413 = vxor.u32 %v412, 2147483648
    %v414 = vmul.f32 %v413, 1.442695
    %v415 = vpow.pop %v414
    %v416 = vadd.f32 %v415, 1.0
    %v417 = vrcp.pop %v416
    %v418 = vmul.f32 %v416, %v417
    %v419 = vsub.f32 1.0, %v418
    %v420 = vmul.f32 %v417, %v419
    %v421 = vadd.f32 %v417, %v420
    %vm422 = vweird.f32 %v416
    %vm423 = vweird.f32 %v417
    %vm424 = vmor %vm422, %vm423
    %v425 = vsel %vm424, %v417, %v421
    %v426 = vand.u32 2147483647, %v416
    %vm427 = vcmp.eq.f32.partialorder %v426, 8.507059e+37
    %v428 = vand.u32 %v416, 2147483648
    %v429 = vor.u32 1.1754944e-38, %v428
    %v430 = vsel %vm427, %v429, %v425
    %v431 = vmul.f32 1.0, %v430
    %432 = vmatpush.msra.mxu0 %v242
    %433 = vmatpush.msra.mxu0 %v241
    %434 = vmatpush.msra.mxu0 %v240
    %435 = vmatpush.msra.mxu0 %v239
    %436 = vmatpush.msra.mxu0 %v238
    %437 = vmatpush.msra.mxu0 %v237
    %438 = vmatpush.msra.mxu0 %v236
    %439 = vmatpush.msra.mxu0 %v235
    %440 = vmatpush.msra.mxu0 %v234
    %441 = vmatpush.msra.mxu0 %v233
    %442 = vmatpush.msra.mxu0 %v232
    %443 = vmatpush.msra.mxu0 %v231
    %444 = vmatpush.msra.mxu0 %v230
    %445 = vmatpush.msra.mxu0 %v229
    %446 = vmatpush.msra.mxu0 %v228
    %447 = vmatpush.msra.mxu0 %v227
    %448 = vmatmul.f32.gmra.mxu0 %v351
    %v449 = vpop.f32.mrf.mxu0
    %v450 = vadd.f32 %v244, %v449
    %451 = vdwg.mxu0
    %v452 = vmul.f32 %v411, %v450
    %v453 = vadd.f32 %v175, %v452
    %v454 = vtanh.pop %v453
    %v455 = vsub.f32 1.0, %v431
    %v456 = vmul.f32 %v455, %v454
    %v457 = vmul.f32 %v431, %v351
    %v458 = vadd.f32 %v456, %v457
    %459 = vmatpush.msra.mxu0 %v210
    %460 = vmatpush.msra.mxu0 %v209
    %461 = vmatpush.msra.mxu0 %v208
    %462 = vmatpush.msra.mxu0 %v207
    %463 = vmatpush.msra.mxu0 %v206
    %464 = vmatpush.msra.mxu0 %v205
    %465 = vmatpush.msra.mxu0 %v204
    %466 = vmatpush.msra.mxu0 %v203
    %467 = vmatpush.msra.mxu0 %v202
    %468 = vmatpush.msra.mxu0 %v201
    %469 = vmatpush.msra.mxu0 %v200
    %470 = vmatpush.msra.mxu0 %v199
    %471 = vmatpush.msra.mxu0 %v198
    %472 = vmatpush.msra.mxu0 %v197
    %473 = vmatpush.msra.mxu0 %v196
    %474 = vmatpush.msra.mxu0 %v195
    %475 = vmatmul.f32.gmra.mxu0 %v458
    %v476 = vpop.f32.mrf.mxu0
    %v477 = vadd.f32 0.0, %v476
    %478 = vdwg.mxu0
    %479 = vmatpush.msra.mxu0 %v226
    %480 = vmatpush.msra.mxu0 %v225
    %481 = vmatpush.msra.mxu0 %v224
    %482 = vmatpush.msra.mxu0 %v223
    %483 = vmatpush.msra.mxu0 %v222
    %484 = vmatpush.msra.mxu0 %v221
    %485 = vmatpush.msra.mxu0 %v220
    %486 = vmatpush.msra.mxu0 %v219
    %487 = vmatpush.msra.mxu0 %v218
    %488 = vmatpush.msra.mxu0 %v217
    %489 = vmatpush.msra.mxu0 %v216
    %490 = vmatpush.msra.mxu0 %v215
    %491 = vmatpush.msra.mxu0 %v214
    %492 = vmatpush.msra.mxu0 %v213
    %493 = vmatpush.msra.mxu0 %v212
    %494 = vmatpush.msra.mxu0 %v211
    %495 = vmatmul.f32.gmra.mxu0 %v458
    %v496 = vpop.f32.mrf.mxu0
    %v497 = vadd.f32 0.0, %v496
    %498 = vdwg.mxu0
    %v499 = vadd.f32 %v88, %v477
    %v500 = vxor.u32 %v499, 2147483648
    %v501 = vmul.f32 %v500, 1.442695
    %v502 = vpow.pop %v501
    %v503 = vadd.f32 %v502, 1.0
    %v504 = vrcp.pop %v503
    %v505 = vmul.f32 %v503, %v504
    %v506 = vsub.f32 1.0, %v505
    %v507 = vmul.f32 %v504, %v506
    %v508 = vadd.f32 %v504, %v507
    %vm509 = vweird.f32 %v503
    %vm510 = vweird.f32 %v504
    %vm511 = vmor %vm509, %vm510
    %v512 = vsel %vm511, %v504, %v508
    %v513 = vand.u32 2147483647, %v503
    %vm514 = vcmp.eq.f32.partialorder %v513, 8.507059e+37
    %v515 = vand.u32 %v503, 2147483648
    %v516 = vor.u32 1.1754944e-38, %v515
    %v517 = vsel %vm514, %v516, %v512
    %v518 = vmul.f32 1.0, %v517
    %v519 = vadd.f32 %v133, %v497
    %v520 = vxor.u32 %v519, 2147483648
    %v521 = vmul.f32 %v520, 1.442695
    %v522 = vpow.pop %v521
    %v523 = vadd.f32 %v522, 1.0
    %v524 = vrcp.pop %v523
    %v525 = vmul.f32 %v523, %v524
    %v526 = vsub.f32 1.0, %v525
    %v527 = vmul.f32 %v524, %v526
    %v528 = vadd.f32 %v524, %v527
    %vm529 = vweird.f32 %v523
    %vm530 = vweird.f32 %v524
    %vm531 = vmor %vm529, %vm530
    %v532 = vsel %vm531, %v524, %v528
    %v533 = vand.u32 2147483647, %v523
    %vm534 = vcmp.eq.f32.partialorder %v533, 8.507059e+37
    %v535 = vand.u32 %v523, 2147483648
    %v536 = vor.u32 1.1754944e-38, %v535
    %v537 = vsel %vm534, %v536, %v532
    %v538 = vmul.f32 1.0, %v537
    %539 = vmatpush.msra.mxu0 %v242
    %540 = vmatpush.msra.mxu0 %v241
    %541 = vmatpush.msra.mxu0 %v240
    %542 = vmatpush.msra.mxu0 %v239
    %543 = vmatpush.msra.mxu0 %v238
    %544 = vmatpush.msra.mxu0 %v237
    %545 = vmatpush.msra.mxu0 %v236
    %546 = vmatpush.msra.mxu0 %v235
    %547 = vmatpush.msra.mxu0 %v234
    %548 = vmatpush.msra.mxu0 %v233
    %549 = vmatpush.msra.mxu0 %v232
    %550 = vmatpush.msra.mxu0 %v231
    %551 = vmatpush.msra.mxu0 %v230
    %552 = vmatpush.msra.mxu0 %v229
    %553 = vmatpush.msra.mxu0 %v228
    %554 = vmatpush.msra.mxu0 %v227
    %555 = vmatmul.f32.gmra.mxu0 %v458
    %v556 = vpop.f32.mrf.mxu0
    %v557 = vadd.f32 %v244, %v556
    %558 = vdwg.mxu0
    %v559 = vmul.f32 %v518, %v557
    %v560 = vadd.f32 %v178, %v559
    %v561 = vtanh.pop %v560
    %v562 = vsub.f32 1.0, %v538
    %v563 = vmul.f32 %v562, %v561
    %v564 = vmul.f32 %v538, %v458
    %v565 = vadd.f32 %v563, %v564
    %566 = vmatpush.msra.mxu0 %v210
    %567 = vmatpush.msra.mxu0 %v209
    %568 = vmatpush.msra.mxu0 %v208
    %569 = vmatpush.msra.mxu0 %v207
    %570 = vmatpush.msra.mxu0 %v206
    %571 = vmatpush.msra.mxu0 %v205
    %572 = vmatpush.msra.mxu0 %v204
    %573 = vmatpush.msra.mxu0 %v203
    %574 = vmatpush.msra.mxu0 %v202
    %575 = vmatpush.msra.mxu0 %v201
    %576 = vmatpush.msra.mxu0 %v200
    %577 = vmatpush.msra.mxu0 %v199
    %578 = vmatpush.msra.mxu0 %v198
    %579 = vmatpush.msra.mxu0 %v197
    %580 = vmatpush.msra.mxu0 %v196
    %581 = vmatpush.msra.mxu0 %v195
    %582 = vmatmul.f32.gmra.mxu0 %v565
    %v583 = vpop.f32.mrf.mxu0
    %v584 = vadd.f32 0.0, %v583
    %585 = vdwg.mxu0
    %586 = vmatpush.msra.mxu0 %v226
    %587 = vmatpush.msra.mxu0 %v225
    %588 = vmatpush.msra.mxu0 %v224
    %589 = vmatpush.msra.mxu0 %v223
    %590 = vmatpush.msra.mxu0 %v222
    %591 = vmatpush.msra.mxu0 %v221
    %592 = vmatpush.msra.mxu0 %v220
    %593 = vmatpush.msra.mxu0 %v219
    %594 = vmatpush.msra.mxu0 %v218
    %595 = vmatpush.msra.mxu0 %v217
    %596 = vmatpush.msra.mxu0 %v216
    %597 = vmatpush.msra.mxu0 %v215
    %598 = vmatpush.msra.mxu0 %v214
    %599 = vmatpush.msra.mxu0 %v213
    %600 = vmatpush.msra.mxu0 %v212
    %601 = vmatpush.msra.mxu0 %v211
    %602 = vmatmul.f32.gmra.mxu0 %v565
    %v603 = vpop.f32.mrf.mxu0
    %v604 = vadd.f32 0.0, %v603
    %605 = vdwg.mxu0
    %v606 = vadd.f32 %v91, %v584
    %v607 = vxor.u32 %v606, 2147483648
    %v608 = vmul.f32 %v607, 1.442695
    %v609 = vpow.pop %v608
    %v610 = vadd.f32 %v609, 1.0
    %v611 = vrcp.pop %v610
    %v612 = vmul.f32 %v610, %v611
    %v613 = vsub.f32 1.0, %v612
    %v614 = vmul.f32 %v611, %v613
    %v615 = vadd.f32 %v611, %v614
    %vm616 = vweird.f32 %v610
    %vm617 = vweird.f32 %v611
    %vm618 = vmor %vm616, %vm617
    %v619 = vsel %vm618, %v611, %v615
    %v620 = vand.u32 2147483647, %v610
    %vm621 = vcmp.eq.f32.partialorder %v620, 8.507059e+37
    %v622 = vand.u32 %v610, 2147483648
    %v623 = vor.u32 1.1754944e-38, %v622
    %v624 = vsel %vm621, %v623, %v619
    %v625 = vmul.f32 1.0, %v624
    %v626 = vadd.f32 %v136, %v604
    %v627 = vxor.u32 %v626, 2147483648
    %v628 = vmul.f32 %v627, 1.442695
    %v629 = vpow.pop %v628
    %v630 = vadd.f32 %v629, 1.0
    %v631 = vrcp.pop %v630
    %v632 = vmul.f32 %v630, %v631
    %v633 = vsub.f32 1.0, %v632
    %v634 = vmul.f32 %v631, %v633
    %v635 = vadd.f32 %v631, %v634
    %vm636 = vweird.f32 %v630
    %vm637 = vweird.f32 %v631
    %vm638 = vmor %vm636, %vm637
    %v639 = vsel %vm638, %v631, %v635
    %v640 = vand.u32 2147483647, %v630
    %vm641 = vcmp.eq.f32.partialorder %v640, 8.507059e+37
    %v642 = vand.u32 %v630, 2147483648
    %v643 = vor.u32 1.1754944e-38, %v642
    %v644 = vsel %vm641, %v643, %v639
    %v645 = vmul.f32 1.0, %v644
    %646 = vmatpush.msra.mxu0 %v242
    %647 = vmatpush.msra.mxu0 %v241
    %648 = vmatpush.msra.mxu0 %v240
    %649 = vmatpush.msra.mxu0 %v239
    %650 = vmatpush.msra.mxu0 %v238
    %651 = vmatpush.msra.mxu0 %v237
    %652 = vmatpush.msra.mxu0 %v236
    %653 = vmatpush.msra.mxu0 %v235
    %654 = vmatpush.msra.mxu0 %v234
    %655 = vmatpush.msra.mxu0 %v233
    %656 = vmatpush.msra.mxu0 %v232
    %657 = vmatpush.msra.mxu0 %v231
    %658 = vmatpush.msra.mxu0 %v230
    %659 = vmatpush.msra.mxu0 %v229
    %660 = vmatpush.msra.mxu0 %v228
    %661 = vmatpush.msra.mxu0 %v227
    %662 = vmatmul.f32.gmra.mxu0 %v565
    %v663 = vpop.f32.mrf.mxu0
    %v664 = vadd.f32 %v244, %v663
    %665 = vdwg.mxu0
    %v666 = vmul.f32 %v625, %v664
    %v667 = vadd.f32 %v181, %v666
    %v668 = vtanh.pop %v667
    %v669 = vsub.f32 1.0, %v645
    %v670 = vmul.f32 %v669, %v668
    %v671 = vmul.f32 %v645, %v565
    %v672 = vadd.f32 %v670, %v671
    %673 = vmatpush.msra.mxu0 %v210
    %674 = vmatpush.msra.mxu0 %v209
    %675 = vmatpush.msra.mxu0 %v208
    %676 = vmatpush.msra.mxu0 %v207
    %677 = vmatpush.msra.mxu0 %v206
    %678 = vmatpush.msra.mxu0 %v205
    %679 = vmatpush.msra.mxu0 %v204
    %680 = vmatpush.msra.mxu0 %v203
    %681 = vmatpush.msra.mxu0 %v202
    %682 = vmatpush.msra.mxu0 %v201
    %683 = vmatpush.msra.mxu0 %v200
    %684 = vmatpush.msra.mxu0 %v199
    %685 = vmatpush.msra.mxu0 %v198
    %686 = vmatpush.msra.mxu0 %v197
    %687 = vmatpush.msra.mxu0 %v196
    %688 = vmatpush.msra.mxu0 %v195
    %689 = vmatmul.f32.gmra.mxu0 %v672
    %v690 = vpop.f32.mrf.mxu0
    %v691 = vadd.f32 0.0, %v690
    %692 = vdwg.mxu0
    %693 = vmatpush.msra.mxu0 %v226
    %694 = vmatpush.msra.mxu0 %v225
    %695 = vmatpush.msra.mxu0 %v224
    %696 = vmatpush.msra.mxu0 %v223
    %697 = vmatpush.msra.mxu0 %v222
    %698 = vmatpush.msra.mxu0 %v221
    %699 = vmatpush.msra.mxu0 %v220
    %700 = vmatpush.msra.mxu0 %v219
    %701 = vmatpush.msra.mxu0 %v218
    %702 = vmatpush.msra.mxu0 %v217
    %703 = vmatpush.msra.mxu0 %v216
    %704 = vmatpush.msra.mxu0 %v215
    %705 = vmatpush.msra.mxu0 %v214
    %706 = vmatpush.msra.mxu0 %v213
    %707 = vmatpush.msra.mxu0 %v212
    %708 = vmatpush.msra.mxu0 %v211
    %709 = vmatmul.f32.gmra.mxu0 %v672
    %v710 = vpop.f32.mrf.mxu0
    %v711 = vadd.f32 0.0, %v710
    %712 = vdwg.mxu0
    %v713 = vadd.f32 %v94, %v691
    %v714 = vxor.u32 %v713, 2147483648
    %v715 = vmul.f32 %v714, 1.442695
    %v716 = vpow.pop %v715
    %v717 = vadd.f32 %v716, 1.0
    %v718 = vrcp.pop %v717
    %v719 = vmul.f32 %v717, %v718
    %v720 = vsub.f32 1.0, %v719
    %v721 = vmul.f32 %v718, %v720
    %v722 = vadd.f32 %v718, %v721
    %vm723 = vweird.f32 %v717
    %vm724 = vweird.f32 %v718
    %vm725 = vmor %vm723, %vm724
    %v726 = vsel %vm725, %v718, %v722
    %v727 = vand.u32 2147483647, %v717
    %vm728 = vcmp.eq.f32.partialorder %v727, 8.507059e+37
    %v729 = vand.u32 %v717, 2147483648
    %v730 = vor.u32 1.1754944e-38, %v729
    %v731 = vsel %vm728, %v730, %v726
    %v732 = vmul.f32 1.0, %v731
    %v733 = vadd.f32 %v139, %v711
    %v734 = vxor.u32 %v733, 2147483648
    %v735 = vmul.f32 %v734, 1.442695
    %v736 = vpow.pop %v735
    %v737 = vadd.f32 %v736, 1.0
    %v738 = vrcp.pop %v737
    %v739 = vmul.f32 %v737, %v738
    %v740 = vsub.f32 1.0, %v739
    %v741 = vmul.f32 %v738, %v740
    %v742 = vadd.f32 %v738, %v741
    %vm743 = vweird.f32 %v737
    %vm744 = vweird.f32 %v738
    %vm745 = vmor %vm743, %vm744
    %v746 = vsel %vm745, %v738, %v742
    %v747 = vand.u32 2147483647, %v737
    %vm748 = vcmp.eq.f32.partialorder %v747, 8.507059e+37
    %v749 = vand.u32 %v737, 2147483648
    %v750 = vor.u32 1.1754944e-38, %v749
    %v751 = vsel %vm748, %v750, %v746
    %v752 = vmul.f32 1.0, %v751
    %753 = vmatpush.msra.mxu0 %v242
    %754 = vmatpush.msra.mxu0 %v241
    %755 = vmatpush.msra.mxu0 %v240
    %756 = vmatpush.msra.mxu0 %v239
    %757 = vmatpush.msra.mxu0 %v238
    %758 = vmatpush.msra.mxu0 %v237
    %759 = vmatpush.msra.mxu0 %v236
    %760 = vmatpush.msra.mxu0 %v235
    %761 = vmatpush.msra.mxu0 %v234
    %762 = vmatpush.msra.mxu0 %v233
    %763 = vmatpush.msra.mxu0 %v232
    %764 = vmatpush.msra.mxu0 %v231
    %765 = vmatpush.msra.mxu0 %v230
    %766 = vmatpush.msra.mxu0 %v229
    %767 = vmatpush.msra.mxu0 %v228
    %768 = vmatpush.msra.mxu0 %v227
    %769 = vmatmul.f32.gmra.mxu0 %v672
    %v770 = vpop.f32.mrf.mxu0
    %v771 = vadd.f32 %v244, %v770
    %772 = vdwg.mxu0
    %v773 = vmul.f32 %v732, %v771
    %v774 = vadd.f32 %v184, %v773
    %v775 = vtanh.pop %v774
    %v776 = vsub.f32 1.0, %v752
    %v777 = vmul.f32 %v776, %v775
    %v778 = vmul.f32 %v752, %v672
    %v779 = vadd.f32 %v777, %v778
    %780 = vmatpush.msra.mxu0 %v210
    %781 = vmatpush.msra.mxu0 %v209
    %782 = vmatpush.msra.mxu0 %v208
    %783 = vmatpush.msra.mxu0 %v207
    %784 = vmatpush.msra.mxu0 %v206
    %785 = vmatpush.msra.mxu0 %v205
    %786 = vmatpush.msra.mxu0 %v204
    %787 = vmatpush.msra.mxu0 %v203
    %788 = vmatpush.msra.mxu0 %v202
    %789 = vmatpush.msra.mxu0 %v201
    %790 = vmatpush.msra.mxu0 %v200
    %791 = vmatpush.msra.mxu0 %v199
    %792 = vmatpush.msra.mxu0 %v198
    %793 = vmatpush.msra.mxu0 %v197
    %794 = vmatpush.msra.mxu0 %v196
    %795 = vmatpush.msra.mxu0 %v195
    %796 = vmatmul.f32.gmra.mxu0 %v779
    %v797 = vpop.f32.mrf.mxu0
    %v798 = vadd.f32 0.0, %v797
    %799 = vdwg.mxu0
    %800 = vmatpush.msra.mxu0 %v226
    %801 = vmatpush.msra.mxu0 %v225
    %802 = vmatpush.msra.mxu0 %v224
    %803 = vmatpush.msra.mxu0 %v223
    %804 = vmatpush.msra.mxu0 %v222
    %805 = vmatpush.msra.mxu0 %v221
    %806 = vmatpush.msra.mxu0 %v220
    %807 = vmatpush.msra.mxu0 %v219
    %808 = vmatpush.msra.mxu0 %v218
    %809 = vmatpush.msra.mxu0 %v217
    %810 = vmatpush.msra.mxu0 %v216
    %811 = vmatpush.msra.mxu0 %v215
    %812 = vmatpush.msra.mxu0 %v214
    %813 = vmatpush.msra.mxu0 %v213
    %814 = vmatpush.msra.mxu0 %v212
    %815 = vmatpush.msra.mxu0 %v211
    %816 = vmatmul.f32.gmra.mxu0 %v779
    %v817 = vpop.f32.mrf.mxu0
    %v818 = vadd.f32 0.0, %v817
    %819 = vdwg.mxu0
    %v820 = vadd.f32 %v97, %v798
    %v821 = vxor.u32 %v820, 2147483648
    %v822 = vmul.f32 %v821, 1.442695
    %v823 = vpow.pop %v822
    %v824 = vadd.f32 %v823, 1.0
    %v825 = vrcp.pop %v824
    %v826 = vmul.f32 %v824, %v825
    %v827 = vsub.f32 1.0, %v826
    %v828 = vmul.f32 %v825, %v827
    %v829 = vadd.f32 %v825, %v828
    %vm830 = vweird.f32 %v824
    %vm831 = vweird.f32 %v825
    %vm832 = vmor %vm830, %vm831
    %v833 = vsel %vm832, %v825, %v829
    %v834 = vand.u32 2147483647, %v824
    %vm835 = vcmp.eq.f32.partialorder %v834, 8.507059e+37
    %v836 = vand.u32 %v824, 2147483648
    %v837 = vor.u32 1.1754944e-38, %v836
    %v838 = vsel %vm835, %v837, %v833
    %v839 = vmul.f32 1.0, %v838
    %v840 = vadd.f32 %v142, %v818
    %v841 = vxor.u32 %v840, 2147483648
    %v842 = vmul.f32 %v841, 1.442695
    %v843 = vpow.pop %v842
    %v844 = vadd.f32 %v843, 1.0
    %v845 = vrcp.pop %v844
    %v846 = vmul.f32 %v844, %v845
    %v847 = vsub.f32 1.0, %v846
    %v848 = vmul.f32 %v845, %v847
    %v849 = vadd.f32 %v845, %v848
    %vm850 = vweird.f32 %v844
    %vm851 = vweird.f32 %v845
    %vm852 = vmor %vm850, %vm851
    %v853 = vsel %vm852, %v845, %v849
    %v854 = vand.u32 2147483647, %v844
    %vm855 = vcmp.eq.f32.partialorder %v854, 8.507059e+37
    %v856 = vand.u32 %v844, 2147483648
    %v857 = vor.u32 1.1754944e-38, %v856
    %v858 = vsel %vm855, %v857, %v853
    %v859 = vmul.f32 1.0, %v858
    %860 = vmatpush.msra.mxu0 %v242
    %861 = vmatpush.msra.mxu0 %v241
    %862 = vmatpush.msra.mxu0 %v240
    %863 = vmatpush.msra.mxu0 %v239
    %864 = vmatpush.msra.mxu0 %v238
    %865 = vmatpush.msra.mxu0 %v237
    %866 = vmatpush.msra.mxu0 %v236
    %867 = vmatpush.msra.mxu0 %v235
    %868 = vmatpush.msra.mxu0 %v234
    %869 = vmatpush.msra.mxu0 %v233
    %870 = vmatpush.msra.mxu0 %v232
    %871 = vmatpush.msra.mxu0 %v231
    %872 = vmatpush.msra.mxu0 %v230
    %873 = vmatpush.msra.mxu0 %v229
    %874 = vmatpush.msra.mxu0 %v228
    %875 = vmatpush.msra.mxu0 %v227
    %876 = vmatmul.f32.gmra.mxu0 %v779
    %v877 = vpop.f32.mrf.mxu0
    %v878 = vadd.f32 %v244, %v877
    %879 = vdwg.mxu0
    %v880 = vmul.f32 %v839, %v878
    %v881 = vadd.f32 %v187, %v880
    %v882 = vtanh.pop %v881
    %v883 = vsub.f32 1.0, %v859
    %v884 = vmul.f32 %v883, %v882
    %v885 = vmul.f32 %v859, %v779
    %v886 = vadd.f32 %v884, %v885
    %887 = vmatpush.msra.mxu0 %v210
    %888 = vmatpush.msra.mxu0 %v209
    %889 = vmatpush.msra.mxu0 %v208
    %890 = vmatpush.msra.mxu0 %v207
    %891 = vmatpush.msra.mxu0 %v206
    %892 = vmatpush.msra.mxu0 %v205
    %893 = vmatpush.msra.mxu0 %v204
    %894 = vmatpush.msra.mxu0 %v203
    %895 = vmatpush.msra.mxu0 %v202
    %896 = vmatpush.msra.mxu0 %v201
    %897 = vmatpush.msra.mxu0 %v200
    %898 = vmatpush.msra.mxu0 %v199
    %899 = vmatpush.msra.mxu0 %v198
    %900 = vmatpush.msra.mxu0 %v197
    %901 = vmatpush.msra.mxu0 %v196
    %902 = vmatpush.msra.mxu0 %v195
    %903 = vmatmul.f32.gmra.mxu0 %v886
    %v904 = vpop.f32.mrf.mxu0
    %v905 = vadd.f32 0.0, %v904
    %906 = vdwg.mxu0
    %907 = vmatpush.msra.mxu0 %v226
    %908 = vmatpush.msra.mxu0 %v225
    %909 = vmatpush.msra.mxu0 %v224
    %910 = vmatpush.msra.mxu0 %v223
    %911 = vmatpush.msra.mxu0 %v222
    %912 = vmatpush.msra.mxu0 %v221
    %913 = vmatpush.msra.mxu0 %v220
    %914 = vmatpush.msra.mxu0 %v219
    %915 = vmatpush.msra.mxu0 %v218
    %916 = vmatpush.msra.mxu0 %v217
    %917 = vmatpush.msra.mxu0 %v216
    %918 = vmatpush.msra.mxu0 %v215
    %919 = vmatpush.msra.mxu0 %v214
    %920 = vmatpush.msra.mxu0 %v213
    %921 = vmatpush.msra.mxu0 %v212
    %922 = vmatpush.msra.mxu0 %v211
    %923 = vmatmul.f32.gmra.mxu0 %v886
    %v924 = vpop.f32.mrf.mxu0
    %v925 = vadd.f32 0.0, %v924
    %926 = vdwg.mxu0
    %v927 = vadd.f32 %v100, %v905
    %v928 = vxor.u32 %v927, 2147483648
    %v929 = vmul.f32 %v928, 1.442695
    %v930 = vpow.pop %v929
    %v931 = vadd.f32 %v930, 1.0
    %v932 = vrcp.pop %v931
    %v933 = vmul.f32 %v931, %v932
    %v934 = vsub.f32 1.0, %v933
    %v935 = vmul.f32 %v932, %v934
    %v936 = vadd.f32 %v932, %v935
    %vm937 = vweird.f32 %v931
    %vm938 = vweird.f32 %v932
    %vm939 = vmor %vm937, %vm938
    %v940 = vsel %vm939, %v932, %v936
    %v941 = vand.u32 2147483647, %v931
    %vm942 = vcmp.eq.f32.partialorder %v941, 8.507059e+37
    %v943 = vand.u32 %v931, 2147483648
    %v944 = vor.u32 1.1754944e-38, %v943
    %v945 = vsel %vm942, %v944, %v940
    %v946 = vmul.f32 1.0, %v945
    %v947 = vadd.f32 %v145, %v925
    %v948 = vxor.u32 %v947, 2147483648
    %v949 = vmul.f32 %v948, 1.442695
    %v950 = vpow.pop %v949
    %v951 = vadd.f32 %v950, 1.0
    %v952 = vrcp.pop %v951
    %v953 = vmul.f32 %v951, %v952
    %v954 = vsub.f32 1.0, %v953
    %v955 = vmul.f32 %v952, %v954
    %v956 = vadd.f32 %v952, %v955
    %vm957 = vweird.f32 %v951
    %vm958 = vweird.f32 %v952
    %vm959 = vmor %vm957, %vm958
    %v960 = vsel %vm959, %v952, %v956
    %v961 = vand.u32 2147483647, %v951
    %vm962 = vcmp.eq.f32.partialorder %v961, 8.507059e+37
    %v963 = vand.u32 %v951, 2147483648
    %v964 = vor.u32 1.1754944e-38, %v963
    %v965 = vsel %vm962, %v964, %v960
    %v966 = vmul.f32 1.0, %v965
    %967 = vmatpush.msra.mxu0 %v242
    %968 = vmatpush.msra.mxu0 %v241
    %969 = vmatpush.msra.mxu0 %v240
    %970 = vmatpush.msra.mxu0 %v239
    %971 = vmatpush.msra.mxu0 %v238
    %972 = vmatpush.msra.mxu0 %v237
    %973 = vmatpush.msra.mxu0 %v236
    %974 = vmatpush.msra.mxu0 %v235
    %975 = vmatpush.msra.mxu0 %v234
    %976 = vmatpush.msra.mxu0 %v233
    %977 = vmatpush.msra.mxu0 %v232
    %978 = vmatpush.msra.mxu0 %v231
    %979 = vmatpush.msra.mxu0 %v230
    %980 = vmatpush.msra.mxu0 %v229
    %981 = vmatpush.msra.mxu0 %v228
    %982 = vmatpush.msra.mxu0 %v227
    %983 = vmatmul.f32.gmra.mxu0 %v886
    %v984 = vpop.f32.mrf.mxu0
    %v985 = vadd.f32 %v244, %v984
    %986 = vdwg.mxu0
    %v987 = vmul.f32 %v946, %v985
    %v988 = vadd.f32 %v190, %v987
    %v989 = vtanh.pop %v988
    %v990 = vsub.f32 1.0, %v966
    %v991 = vmul.f32 %v990, %v989
    %v992 = vmul.f32 %v966, %v886
    %v993 = vadd.f32 %v991, %v992
    %994 = vmatpush.msra.mxu0 %v210
    %995 = vmatpush.msra.mxu0 %v209
    %996 = vmatpush.msra.mxu0 %v208
    %997 = vmatpush.msra.mxu0 %v207
    %998 = vmatpush.msra.mxu0 %v206
    %999 = vmatpush.msra.mxu0 %v205
    %1000 = vmatpush.msra.mxu0 %v204
    %1001 = vmatpush.msra.mxu0 %v203
    %1002 = vmatpush.msra.mxu0 %v202
    %1003 = vmatpush.msra.mxu0 %v201
    %1004 = vmatpush.msra.mxu0 %v200
    %1005 = vmatpush.msra.mxu0 %v199
    %1006 = vmatpush.msra.mxu0 %v198
    %1007 = vmatpush.msra.mxu0 %v197
    %1008 = vmatpush.msra.mxu0 %v196
    %1009 = vmatpush.msra.mxu0 %v195
    %1010 = vmatmul.f32.gmra.mxu0 %v993
    %v1011 = vpop.f32.mrf.mxu0
    %v1012 = vadd.f32 0.0, %v1011
    %1013 = vdwg.mxu0
    %1014 = vmatpush.msra.mxu0 %v226
    %1015 = vmatpush.msra.mxu0 %v225
    %1016 = vmatpush.msra.mxu0 %v224
    %1017 = vmatpush.msra.mxu0 %v223
    %1018 = vmatpush.msra.mxu0 %v222
    %1019 = vmatpush.msra.mxu0 %v221
    %1020 = vmatpush.msra.mxu0 %v220
    %1021 = vmatpush.msra.mxu0 %v219
    %1022 = vmatpush.msra.mxu0 %v218
    %1023 = vmatpush.msra.mxu0 %v217
    %1024 = vmatpush.msra.mxu0 %v216
    %1025 = vmatpush.msra.mxu0 %v215
    %1026 = vmatpush.msra.mxu0 %v214
    %1027 = vmatpush.msra.mxu0 %v213
    %1028 = vmatpush.msra.mxu0 %v212
    %1029 = vmatpush.msra.mxu0 %v211
    %1030 = vmatmul.f32.gmra.mxu0 %v993
    %v1031 = vpop.f32.mrf.mxu0
    %v1032 = vadd.f32 0.0, %v1031
    %1033 = vdwg.mxu0
    %v1034 = vadd.f32 %v103, %v1012
    %v1035 = vxor.u32 %v1034, 2147483648
    %v1036 = vmul.f32 %v1035, 1.442695
    %v1037 = vpow.pop %v1036
    %v1038 = vadd.f32 %v1037, 1.0
    %v1039 = vrcp.pop %v1038
    %v1040 = vmul.f32 %v1038, %v1039
    %v1041 = vsub.f32 1.0, %v1040
    %v1042 = vmul.f32 %v1039, %v1041
    %v1043 = vadd.f32 %v1039, %v1042
    %vm1044 = vweird.f32 %v1038
    %vm1045 = vweird.f32 %v1039
    %vm1046 = vmor %vm1044, %vm1045
    %v1047 = vsel %vm1046, %v1039, %v1043
    %v1048 = vand.u32 2147483647, %v1038
    %vm1049 = vcmp.eq.f32.partialorder %v1048, 8.507059e+37
    %v1050 = vand.u32 %v1038, 2147483648
    %v1051 = vor.u32 1.1754944e-38, %v1050
    %v1052 = vsel %vm1049, %v1051, %v1047
    %v1053 = vmul.f32 1.0, %v1052
    %v1054 = vadd.f32 %v148, %v1032
    %v1055 = vxor.u32 %v1054, 2147483648
    %v1056 = vmul.f32 %v1055, 1.442695
    %v1057 = vpow.pop %v1056
    %v1058 = vadd.f32 %v1057, 1.0
    %v1059 = vrcp.pop %v1058
    %v1060 = vmul.f32 %v1058, %v1059
    %v1061 = vsub.f32 1.0, %v1060
    %v1062 = vmul.f32 %v1059, %v1061
    %v1063 = vadd.f32 %v1059, %v1062
    %vm1064 = vweird.f32 %v1058
    %vm1065 = vweird.f32 %v1059
    %vm1066 = vmor %vm1064, %vm1065
    %v1067 = vsel %vm1066, %v1059, %v1063
    %v1068 = vand.u32 2147483647, %v1058
    %vm1069 = vcmp.eq.f32.partialorder %v1068, 8.507059e+37
    %v1070 = vand.u32 %v1058, 2147483648
    %v1071 = vor.u32 1.1754944e-38, %v1070
    %v1072 = vsel %vm1069, %v1071, %v1067
    %v1073 = vmul.f32 1.0, %v1072
    %1074 = vmatpush.msra.mxu0 %v242
    %1075 = vmatpush.msra.mxu0 %v241
    %1076 = vmatpush.msra.mxu0 %v240
    %1077 = vmatpush.msra.mxu0 %v239
    %1078 = vmatpush.msra.mxu0 %v238
    %1079 = vmatpush.msra.mxu0 %v237
    %1080 = vmatpush.msra.mxu0 %v236
    %1081 = vmatpush.msra.mxu0 %v235
    %1082 = vmatpush.msra.mxu0 %v234
    %1083 = vmatpush.msra.mxu0 %v233
    %1084 = vmatpush.msra.mxu0 %v232
    %1085 = vmatpush.msra.mxu0 %v231
    %1086 = vmatpush.msra.mxu0 %v230
    %1087 = vmatpush.msra.mxu0 %v229
    %1088 = vmatpush.msra.mxu0 %v228
    %1089 = vmatpush.msra.mxu0 %v227
    %1090 = vmatmul.f32.gmra.mxu0 %v993
    %v1091 = vpop.f32.mrf.mxu0
    %v1092 = vadd.f32 %v244, %v1091
    %1093 = vdwg.mxu0
    %v1094 = vmul.f32 %v1053, %v1092
    %v1095 = vadd.f32 %v193, %v1094
    %v1096 = vtanh.pop %v1095
    %v1097 = vsub.f32 1.0, %v1073
    %v1098 = vmul.f32 %v1097, %v1096
    %v1099 = vmul.f32 %v1073, %v993
    %v1100 = vadd.f32 %v1098, %v1099
    %v1101 = vld [vmem:[#allocation2 + $0x30] sm:$0xff]
    %v1102 = vld [vmem:[#allocation2 + $0x38] sm:$0xff]
    %v1103 = vld [vmem:[#allocation2 + $0x300] sm:$0x1]
    %v1104 = vperm.slane %v1103, 0
    %1105 = vmatpush.msra.mxu0 0.0
    %1106 = vmatpush.msra.mxu0 0.0
    %1107 = vmatpush.msra.mxu0 0.0
    %1108 = vmatpush.msra.mxu0 0.0
    %1109 = vmatpush.msra.mxu0 0.0
    %1110 = vmatpush.msra.mxu0 0.0
    %1111 = vmatpush.msra.mxu0 0.0
    %1112 = vmatpush.msra.mxu0 0.0
    %1113 = vmatpush.msra.mxu0 0.0
    %1114 = vmatpush.msra.mxu0 0.0
    %1115 = vmatpush.msra.mxu0 0.0
    %1116 = vmatpush.msra.mxu0 0.0
    %1117 = vmatpush.msra.mxu0 0.0
    %1118 = vmatpush.msra.mxu0 0.0
    %1119 = vmatpush.msra.mxu0 %v1102
    %1120 = vmatpush.msra.mxu0 %v1101
    %1121 = vmatmul.f32.gmra.mxu0 %v62
    %v1122 = vpop.f32.mrf.mxu0
    %v1123 = vadd.f32 %v1104, %v1122
    %1124 = vdwg.mxu0
    %v1125 = vld [vmem:[#allocation2 + $0x40] sm:$0xff]
    %v1126 = vld [vmem:[#allocation2 + $0x48] sm:$0xff]
    %v1127 = vld [vmem:[#allocation2 + $0x308] sm:$0x1]
    %v1128 = vperm.slane %v1127, 0
    %1129 = vmatpush.msra.mxu0 0.0
    %1130 = vmatpush.msra.mxu0 0.0
    %1131 = vmatpush.msra.mxu0 0.0
    %1132 = vmatpush.msra.mxu0 0.0
    %1133 = vmatpush.msra.mxu0 0.0
    %1134 = vmatpush.msra.mxu0 0.0
    %1135 = vmatpush.msra.mxu0 0.0
    %1136 = vmatpush.msra.mxu0 0.0
    %1137 = vmatpush.msra.mxu0 0.0
    %1138 = vmatpush.msra.mxu0 0.0
    %1139 = vmatpush.msra.mxu0 0.0
    %1140 = vmatpush.msra.mxu0 0.0
    %1141 = vmatpush.msra.mxu0 0.0
    %1142 = vmatpush.msra.mxu0 0.0
    %1143 = vmatpush.msra.mxu0 %v1126
    %1144 = vmatpush.msra.mxu0 %v1125
    %1145 = vmatmul.f32.gmra.mxu0 %v62
    %v1146 = vpop.f32.mrf.mxu0
    %v1147 = vadd.f32 %v1128, %v1146
    %1148 = vdwg.mxu0
    %v1149 = vld [vmem:[#allocation2 + $0x50] sm:$0xff]
    %v1150 = vld [vmem:[#allocation2 + $0x58] sm:$0xff]
    %v1151 = vld [vmem:[#allocation2 + $0x310] sm:$0x1]
    %v1152 = vperm.slane %v1151, 0
    %1153 = vmatpush.msra.mxu0 0.0
    %1154 = vmatpush.msra.mxu0 0.0
    %1155 = vmatpush.msra.mxu0 0.0
    %1156 = vmatpush.msra.mxu0 0.0
    %1157 = vmatpush.msra.mxu0 0.0
    %1158 = vmatpush.msra.mxu0 0.0
    %1159 = vmatpush.msra.mxu0 0.0
    %1160 = vmatpush.msra.mxu0 0.0
    %1161 = vmatpush.msra.mxu0 0.0
    %1162 = vmatpush.msra.mxu0 0.0
    %1163 = vmatpush.msra.mxu0 0.0
    %1164 = vmatpush.msra.mxu0 0.0
    %1165 = vmatpush.msra.mxu0 0.0
    %1166 = vmatpush.msra.mxu0 0.0
    %1167 = vmatpush.msra.mxu0 %v1150
    %1168 = vmatpush.msra.mxu0 %v1149
    %1169 = vmatmul.f32.gmra.mxu0 %v62
    %v1170 = vpop.f32.mrf.mxu0
    %v1171 = vadd.f32 %v1152, %v1170
    %1172 = vdwg.mxu0
    %v1173 = vxor.u32 %v1123, 2147483648
    %v1174 = vmul.f32 %v1173, 1.442695
    %v1175 = vpow.pop %v1174
    %v1176 = vadd.f32 %v1175, 1.0
    %v1177 = vrcp.pop %v1176
    %v1178 = vmul.f32 %v1176, %v1177
    %v1179 = vsub.f32 1.0, %v1178
    %v1180 = vmul.f32 %v1177, %v1179
    %v1181 = vadd.f32 %v1177, %v1180
    %vm1182 = vweird.f32 %v1176
    %vm1183 = vweird.f32 %v1177
    %vm1184 = vmor %vm1182, %vm1183
    %v1185 = vsel %vm1184, %v1177, %v1181
    %v1186 = vand.u32 2147483647, %v1176
    %vm1187 = vcmp.eq.f32.partialorder %v1186, 8.507059e+37
    %v1188 = vand.u32 %v1176, 2147483648
    %v1189 = vor.u32 1.1754944e-38, %v1188
    %v1190 = vsel %vm1187, %v1189, %v1185
    %v1191 = vmul.f32 1.0, %v1190
    %v1192 = vxor.u32 %v1147, 2147483648
    %v1193 = vmul.f32 %v1192, 1.442695
    %v1194 = vpow.pop %v1193
    %v1195 = vadd.f32 %v1194, 1.0
    %v1196 = vrcp.pop %v1195
    %v1197 = vmul.f32 %v1195, %v1196
    %v1198 = vsub.f32 1.0, %v1197
    %v1199 = vmul.f32 %v1196, %v1198
    %v1200 = vadd.f32 %v1196, %v1199
    %vm1201 = vweird.f32 %v1195
    %vm1202 = vweird.f32 %v1196
    %vm1203 = vmor %vm1201, %vm1202
    %v1204 = vsel %vm1203, %v1196, %v1200
    %v1205 = vand.u32 2147483647, %v1195
    %vm1206 = vcmp.eq.f32.partialorder %v1205, 8.507059e+37
    %v1207 = vand.u32 %v1195, 2147483648
    %v1208 = vor.u32 1.1754944e-38, %v1207
    %v1209 = vsel %vm1206, %v1208, %v1204
    %v1210 = vmul.f32 1.0, %v1209
    %v1211 = vld [vmem:[#allocation2 + $0x318] sm:$0x1]
    %v1212 = vperm.slane %v1211, 0
    %v1213 = vmul.f32 %v1191, %v1212
    %v1214 = vadd.f32 %v1171, %v1213
    %v1215 = vtanh.pop %v1214
    %v1216 = vsub.f32 1.0, %v1210
    %v1217 = vmul.f32 %v1216, %v1215
    %v1218 = vld [vmem:[#allocation2 + $0x1e0] sm:$0xff]
    %v1219 = vld [vmem:[#allocation2 + $0x1e8] sm:$0xff]
    %v1220 = vld [vmem:[#allocation2 + $0x1f0] sm:$0xff]
    %v1221 = vld [vmem:[#allocation2 + $0x1f8] sm:$0xff]
    %v1222 = vld [vmem:[#allocation2 + $0x200] sm:$0xff]
    %v1223 = vld [vmem:[#allocation2 + $0x208] sm:$0xff]
    %v1224 = vld [vmem:[#allocation2 + $0x210] sm:$0xff]
    %v1225 = vld [vmem:[#allocation2 + $0x218] sm:$0xff]
    %v1226 = vld [vmem:[#allocation2 + $0x220] sm:$0xff]
    %v1227 = vld [vmem:[#allocation2 + $0x228] sm:$0xff]
    %v1228 = vld [vmem:[#allocation2 + $0x230] sm:$0xff]
    %v1229 = vld [vmem:[#allocation2 + $0x238] sm:$0xff]
    %v1230 = vld [vmem:[#allocation2 + $0x240] sm:$0xff]
    %v1231 = vld [vmem:[#allocation2 + $0x248] sm:$0xff]
    %v1232 = vld [vmem:[#allocation2 + $0x250] sm:$0xff]
    %v1233 = vld [vmem:[#allocation2 + $0x258] sm:$0xff]
    %v1234 = vld [vmem:[#allocation2 + $0x260] sm:$0xff]
    %v1235 = vld [vmem:[#allocation2 + $0x268] sm:$0xff]
    %v1236 = vld [vmem:[#allocation2 + $0x270] sm:$0xff]
    %v1237 = vld [vmem:[#allocation2 + $0x278] sm:$0xff]
    %v1238 = vld [vmem:[#allocation2 + $0x280] sm:$0xff]
    %v1239 = vld [vmem:[#allocation2 + $0x288] sm:$0xff]
    %v1240 = vld [vmem:[#allocation2 + $0x290] sm:$0xff]
    %v1241 = vld [vmem:[#allocation2 + $0x298] sm:$0xff]
    %v1242 = vld [vmem:[#allocation2 + $0x2a0] sm:$0xff]
    %v1243 = vld [vmem:[#allocation2 + $0x2a8] sm:$0xff]
    %v1244 = vld [vmem:[#allocation2 + $0x2b0] sm:$0xff]
    %v1245 = vld [vmem:[#allocation2 + $0x2b8] sm:$0xff]
    %v1246 = vld [vmem:[#allocation2 + $0x2c0] sm:$0xff]
    %v1247 = vld [vmem:[#allocation2 + $0x2c8] sm:$0xff]
    %v1248 = vld [vmem:[#allocation2 + $0x2d0] sm:$0xff]
    %v1249 = vld [vmem:[#allocation2 + $0x2d8] sm:$0xff]
    %1250 = vmatpush.msra.mxu0 %v1249
    %1251 = vmatpush.msra.mxu0 %v1248
    %1252 = vmatpush.msra.mxu0 %v1247
    %1253 = vmatpush.msra.mxu0 %v1246
    %1254 = vmatpush.msra.mxu0 %v1245
    %1255 = vmatpush.msra.mxu0 %v1244
    %1256 = vmatpush.msra.mxu0 %v1243
    %1257 = vmatpush.msra.mxu0 %v1242
    %1258 = vmatpush.msra.mxu0 %v1241
    %1259 = vmatpush.msra.mxu0 %v1240
    %1260 = vmatpush.msra.mxu0 %v1239
    %1261 = vmatpush.msra.mxu0 %v1238
    %1262 = vmatpush.msra.mxu0 %v1237
    %1263 = vmatpush.msra.mxu0 %v1236
    %1264 = vmatpush.msra.mxu0 %v1235
    %1265 = vmatpush.msra.mxu0 %v1234
    %1266 = vmatmul.f32.gmra.mxu0 %v1217
    %v1267 = vpop.f32.mrf.mxu0
    %v1268 = vadd.f32 0.0, %v1267
    %1269 = vdwg.mxu0
    %1270 = vmatpush.msra.mxu0 %v1233
    %1271 = vmatpush.msra.mxu0 %v1232
    %1272 = vmatpush.msra.mxu0 %v1231
    %1273 = vmatpush.msra.mxu0 %v1230
    %1274 = vmatpush.msra.mxu0 %v1229
    %1275 = vmatpush.msra.mxu0 %v1228
    %1276 = vmatpush.msra.mxu0 %v1227
    %1277 = vmatpush.msra.mxu0 %v1226
    %1278 = vmatpush.msra.mxu0 %v1225
    %1279 = vmatpush.msra.mxu0 %v1224
    %1280 = vmatpush.msra.mxu0 %v1223
    %1281 = vmatpush.msra.mxu0 %v1222
    %1282 = vmatpush.msra.mxu0 %v1221
    %1283 = vmatpush.msra.mxu0 %v1220
    %1284 = vmatpush.msra.mxu0 %v1219
    %1285 = vmatpush.msra.mxu0 %v1218
    %1286 = vmatmul.f32.gmra.mxu0 %v1100
    %v1287 = vpop.f32.mrf.mxu0
    %v1288 = vadd.f32 %v1268, %v1287
    %1289 = vdwg.mxu0
    %v1290 = vld [vmem:[#allocation2 + $0x320] sm:$0x1]
    %v1291 = vperm.slane %v1290, 0
    %v1292 = vadd.f32 %v1288, %v1291
    %v1293 = vtanh.pop %v1292
    %1294 = vst [vmem:[%s2] sm:$0xff] %v1293
    // Predicated region
    $region14: #{forward.1} parent=1 // pred_check
      _
    $region15: #{forward.1} parent=1 // pred_check_branch
      %1296 = sbr.rel (0) target = $region17
    $region16: #{forward.1} parent=1 // pred_region
      _
    $region17: #{forward.1} parent=1 // pred_fallthru
      _
    // Predicated region
    $region18: #{forward.1} parent=1 // pred_check
      _
    $region19: #{forward.1} parent=1 // pred_check_branch
      %1298 = sbr.rel (0) target = $region21
    $region20: #{forward.1} parent=1 // pred_region
      _
    $region21: #{forward.1} parent=1 // pred_fallthru
      _
    %1299 = vsyncpa [#allocation3], 1

</llo_original>
